<compile_context>
chip_gen: v7x
topology: tpu7x:2x2x1
jax: 0.10.0
libtpu: 0.0.40
codegen_flags: <defaults>
</compile_context>

<pallas_src>
import math
import functools

import jax
import jax.numpy as jnp
from jax.experimental import pallas as pl
from jax.experimental.pallas import tpu as pltpu


# --------------------------------------------------------------------------- #
# Kernel: one fused MAB step over TB batch elements and one q-tile.
# Layout-agnostic: Q/K/O blocks may arrive 3-D (TB, rows, dim) or lane-dense
# 2-D (TB, rows*dim); static sizes come in via functools.partial.
# --------------------------------------------------------------------------- #
def _mab_kernel(q_ref, k_ref, wq_ref, bq_ref, wkv_ref, bkv_ref, wo_ref, bo_ref,
                o_ref, *a_refs, num_heads, tq, nk, mxu_dtype):
    tb = q_ref.shape[0]
    dim_q = wq_ref.shape[0]
    dim_k = wkv_ref.shape[0]
    dim_v = wq_ref.shape[1]
    ds = dim_v // num_heads
    m_rows = tb * tq
    k_rows = tb * nk

    qin = q_ref[...].reshape(m_rows, dim_q).astype(mxu_dtype)
    kin = k_ref[...].reshape(k_rows, dim_k).astype(mxu_dtype)

    # fc_q and fused fc_k|fc_v: weights already in mxu_dtype (cast once in the
    # wrapper); f32 accumulation; biases stay f32.
    qp = jnp.dot(qin, wq_ref[...], preferred_element_type=jnp.float32) + bq_ref[...]
    kvp = jnp.dot(kin, wkv_ref[...], preferred_element_type=jnp.float32) + bkv_ref[...]
    # 1/sqrt(dim_V) is folded into the K half of wkv/bkv by the wrapper, so qp
    # stays unscaled for the residual and no per-step scale multiply is needed.

    # Head-major stacks (H, rows, ds): static lane slices + leading-axis stack.
    # TODO(synk): at ds < 128 these slices materialise small vreg copies; a
    # VPU/XLU broadcast-reduce attention would avoid them but is a larger
    # restructure (feedback item for ds <= 16).
    qh = jnp.stack([qp[:, h * ds:(h + 1) * ds] for h in range(num_heads)], axis=0)
    kh = jnp.stack([kvp[:, h * ds:(h + 1) * ds] for h in range(num_heads)], axis=0)
    vh = jnp.stack([kvp[:, dim_v + h * ds:dim_v + (h + 1) * ds] for h in range(num_heads)],
                   axis=0)

    qb = qh.reshape(num_heads * tb, tq, ds).astype(mxu_dtype)
    kb = kh.reshape(num_heads * tb, nk, ds).astype(mxu_dtype)
    vb = vh.reshape(num_heads * tb, nk, ds).astype(mxu_dtype)

    # Batched QK^T (contract on last axes, no explicit transpose); one softmax
    # over all (head, batch) rows.  Exact reciprocal so attention rows sum to 1.
    s = jnp.einsum("bqd,bkd->bqk", qb, kb, preferred_element_type=jnp.float32)
    m = jnp.max(s, axis=-1, keepdims=True)
    e = jnp.exp(s - m)
    attn = e * pl.reciprocal(jnp.sum(e, axis=-1, keepdims=True))

    if a_refs:                          # only materialised when the caller wants A
        a_refs[0][...] = attn.reshape(a_refs[0].shape).astype(a_refs[0].dtype)

    ctx = jnp.einsum("bqk,bkd->bqd", attn.astype(mxu_dtype), vb,
                     preferred_element_type=jnp.float32)
    ctx = ctx.reshape(num_heads, m_rows, ds)
    ctx_cat = jnp.concatenate([ctx[h] for h in range(num_heads)], axis=-1)

    out = qp + ctx_cat                                    # O_ = Q_ + A @ V_
    out_fc = jnp.dot(out.astype(mxu_dtype), wo_ref[...],
                     preferred_element_type=jnp.float32) + bo_ref[...]
    out = out + jnp.maximum(out_fc, 0.0)                  # O = O + relu(fc_o(O))

    o_ref[...] = out.reshape(o_ref.shape).astype(o_ref.dtype)


# --------------------------------------------------------------------------- #
# Generation / tile choosers.
# --------------------------------------------------------------------------- #
def _tpu_vmem_and_cores():
    """Best-effort generation query: per-core VMEM bytes and TensorCore count."""
    vmem, cores = 64 << 20, 1           # conservative fallback (v7x per-TC VMEM)
    try:
        info = pltpu.get_tpu_info()
        vmem = int(getattr(info, "vmem_capacity_bytes", vmem))
        for attr in ("num_cores", "core_count", "num_tensorcores"):
            v = getattr(info, attr, None)
            if isinstance(v, int) and v > 0:
                cores = v
                break
    except Exception:
        pass
    return vmem, cores


def _pick_q_tile_and_pad(nq):
    """Return (padded Nq, TQ).  Nq <= 256 -> one full tile; else pad to a
    multiple of 128 and tile by 128/256 so blocks stay (8,128)-aligned."""
    if nq <= 256:
        return nq, nq
    nq_p = nq + (-nq) % 128
    return nq_p, (256 if nq_p % 256 == 0 else 128)


def _pick_batch_tile(b, tq, nk, n_heads, dim_q, dim_k, dim_v, *,
                     budget_bytes, write_attn, min_batch_steps=1, cap=1024):
    """Largest divisor of B fitting the VMEM budget; prefers TB*TQ matching the
    MXU M granularity (>=512 rows, multiples of 256/128)."""
    feasible = [1]
    for tb in range(2, min(b, cap) + 1):
        if b % tb:
            continue
        if (b // tb) < min_batch_steps:
            continue
        io = 8 * (tb * tq * dim_q + tb * nk * dim_k + tb * tq * dim_v)  # 2x-buffered f32 I/O
        if write_attn:
            io += 8 * n_heads * tb * tq * nk
        live = 4 * (4 * tb * tq * dim_v + 4 * tb * nk * dim_v           # in-kernel temps
                    + 3 * n_heads * tb * tq * nk)
        if io + live <= budget_bytes:
            feasible.append(tb)
    key = lambda t: (t * tq >= 512, (t * tq) % 256 == 0, (t * tq) % 128 == 0, t)
    return max(feasible, key=key)


# --------------------------------------------------------------------------- #
# MAB wrapper.
# --------------------------------------------------------------------------- #
def mab_forward(Q, K, params, *, num_heads, mxu_dtype=jnp.bfloat16,
                return_attn=False, attn_dtype=jnp.float32, batch_tile=None):
    """Fused MABSINK forward.  Returns (O, A); A is None unless return_attn.
    A rows (when requested) follow the torch.cat(split(...), 0) order h*B + b."""
    B, Nq, dim_Q = Q.shape
    Bk, Nk, dim_K = K.shape
    assert B == Bk
    dim_V = params["wq"].shape[0]
    H = num_heads
    assert dim_V % H == 0, "dim_V must be divisible by num_heads"

    # --- q tiling (pad query rows so every generation gets aligned tiles) ----
    Nq_p, TQ = _pick_q_tile_and_pad(Nq)
    if Nq_p != Nq:
        Q = jnp.pad(Q, ((0, 0), (0, Nq_p - Nq), (0, 0)))
    QT = Nq_p // TQ

    # --- generation-aware VMEM budget / batch tile ----------------------------
    vmem_cap, n_cores = _tpu_vmem_and_cores()
    vmem_limit = int(min(vmem_cap // 2, 96 << 20))   # ~64 MiB on 128-MiB parts, 32 MiB on v7x
    if batch_tile is None:
        # Keep >=2 batch-grid steps only when megacore sharding can use them.
        min_steps = 2 if (n_cores >= 2 and QT < 2) else 1
        TB = _pick_batch_tile(B, TQ, Nk, H, dim_Q, dim_K, dim_V,
                              budget_bytes=vmem_limit // 2, write_attn=return_attn,
                              min_batch_steps=min_steps)
    else:
        assert B % batch_tile == 0
        TB = batch_tile
    G = B // TB

    # --- weight plumbing (wrapper side, free) ---------------------------------
    # nn.Linear (out,in) -> (in,out); fuse fc_k|fc_v; fold 1/sqrt(dim_V) into the
    # K half (scores only); cast weights once to the MXU dtype.
    scale = 1.0 / math.sqrt(dim_V)
    wqT = params["wq"].T.astype(mxu_dtype)
    wkvT = jnp.concatenate([params["wk"].T * scale, params["wv"].T],
                           axis=1).astype(mxu_dtype)
    woT = params["wo"].T.astype(mxu_dtype)
    bq = params["bq"].reshape(1, dim_V).astype(jnp.float32)
    bkv = jnp.concatenate([params["bk"] * scale, params["bv"]]
                          ).reshape(1, 2 * dim_V).astype(jnp.float32)
    bo = params["bo"].reshape(1, dim_V).astype(jnp.float32)

    # --- lane-dense layouts where the (8,128) block rules allow ---------------
    tb_ok = (TB % 8 == 0) or (TB == B)
    q_flat = tb_ok and (TQ == Nq_p or (TQ * dim_Q) % 128 == 0)
    k_flat = tb_ok
    o_flat = tb_ok and (TQ == Nq_p or (TQ * dim_V) % 128 == 0)

    if q_flat:
        Q_in = Q.reshape(B, Nq_p * dim_Q)
        q_spec = pl.BlockSpec((TB, TQ * dim_Q), lambda g, j: (g, j))
    else:
        Q_in = Q
        q_spec = pl.BlockSpec((TB, TQ, dim_Q), lambda g, j: (g, j, 0))
    if k_flat:
        K_in = K.reshape(B, Nk * dim_K)
        k_spec = pl.BlockSpec((TB, Nk * dim_K), lambda g, j: (g, 0))
    else:
        K_in = K
        k_spec = pl.BlockSpec((TB, Nk, dim_K), lambda g, j: (g, 0, 0))

    if o_flat:
        o_shape = jax.ShapeDtypeStruct((B, Nq_p * dim_V), jnp.float32)
        o_spec = pl.BlockSpec((TB, TQ * dim_V), lambda g, j: (g, j))
    else:
        o_shape = jax.ShapeDtypeStruct((B, Nq_p, dim_V), jnp.float32)
        o_spec = pl.BlockSpec((TB, TQ, dim_V), lambda g, j: (g, j, 0))

    out_shapes = [o_shape]
    out_specs = [o_spec]
    if return_attn:
        # TODO(synk): if A is consumed downstream, attn_dtype=jnp.bfloat16 halves
        # its HBM writeback (the dominant DMA whenever A is kept).
        out_shapes.append(jax.ShapeDtypeStruct((H, B, Nq_p, Nk), attn_dtype))
        out_specs.append(pl.BlockSpec((H, TB, TQ, Nk), lambda g, j: (0, g, j, 0)))

    # Weights/biases: constant block index.  (pl.Buffered(1) single-buffering of
    # these would halve their VMEM footprint on v7x for very large dim_V;
    # negligible at dim_V=32, so left at the default.)
    const = lambda shape: pl.BlockSpec(shape, lambda g, j: (0, 0))

    kernel = functools.partial(_mab_kernel, num_heads=H, tq=TQ, nk=Nk,
                               mxu_dtype=mxu_dtype)

    results = pl.pallas_call(
        kernel,
        out_shape=tuple(out_shapes),
        grid_spec=pltpu.PrefetchScalarGridSpec(
            num_scalar_prefetch=0,
            grid=(G, QT),
            in_specs=[
                q_spec, k_spec,
                const((dim_Q, dim_V)), const((1, dim_V)),        # Wq^T, bq
                const((dim_K, 2 * dim_V)), const((1, 2 * dim_V)),  # [Wk|Wv]^T, [bk|bv]
                const((dim_V, dim_V)), const((1, dim_V)),         # Wo^T, bo
            ],
            out_specs=tuple(out_specs),
        ),
        compiler_params=pltpu.CompilerParams(
            dimension_semantics=("parallel", "parallel"),
            vmem_limit_bytes=vmem_limit),
    )(Q_in, K_in, wqT, bq, wkvT, bkv, woT, bo)

    O = results[0].reshape(B, Nq_p, dim_V)[:, :Nq, :]
    if not return_attn:
        return O, None
    A = results[1][:, :, :Nq, :].reshape(H * B, Nq, Nk)
    return O, A


def isabsink_forward(X, params, *, num_heads, mxu_dtype=jnp.bfloat16):
    """ISABSINK.forward: H = mab0(I.repeat(B,1,1), X); return mab1(X, H).
    Neither MAB materialises the attention matrix (A is discarded here)."""
    B = X.shape[0]
    I = params["I"]
    Y = jnp.broadcast_to(I, (B, I.shape[1], I.shape[2]))
    H0, _ = mab_forward(Y, X, params["mab0"], num_heads=num_heads, mxu_dtype=mxu_dtype)
    O, _ = mab_forward(X, H0, params["mab1"], num_heads=num_heads, mxu_dtype=mxu_dtype)
    return O


# --------------------------------------------------------------------------- #
# Pure-JAX references (mirror the PyTorch code) for verification.
# --------------------------------------------------------------------------- #
def _reference_mab(Q, K, p, num_heads):
    dim_V = p["wq"].shape[0]
    Qp = Q @ p["wq"].T + p["bq"]
    Kp = K @ p["wk"].T + p["bk"]
    Vp = K @ p["wv"].T + p["bv"]
    ds = dim_V // num_heads
    split = lambda X: jnp.concatenate(
        [X[:, :, h * ds:(h + 1) * ds] for h in range(num_heads)], axis=0)
    Q_, K_, V_ = split(Qp), split(Kp), split(Vp)
    S = jnp.einsum("bqd,bkd->bqk", Q_, K_) / math.sqrt(dim_V)
    A = jax.nn.softmax(S, axis=2)
    O_ = Q_ + jnp.einsum("bqk,bkd->bqd", A, V_)
    B = Q.shape[0]
    O = jnp.concatenate([O_[h * B:(h + 1) * B] for h in range(num_heads)], axis=2)
    O = O + jax.nn.relu(O @ p["wo"].T + p["bo"])
    return O, A


def _reference_isab(X, params, num_heads):
    B = X.shape[0]
    I = params["I"]
    Y = jnp.broadcast_to(I, (B, I.shape[1], I.shape[2]))
    H0, _ = _reference_mab(Y, X, params["mab0"], num_heads)
    O, _ = _reference_mab(X, H0, params["mab1"], num_heads)
    return O


# --------------------------------------------------------------------------- #
# Self-test.
# --------------------------------------------------------------------------- #
if __name__ == "__main__":
    # ISABSINK(dim_in=16, dim_out=32, num_heads=4, num_inds=8), B=4, set size N=8.
    B, N = 4, 8
    dim_in, dim_out, num_heads, num_inds = 16, 32, 4, 8

    key = jax.random.PRNGKey(0)
    keys = iter(jax.random.split(key, 32))

    X = jax.random.normal(next(keys), (B, N, dim_in), dtype=jnp.float32)

    def lin_init(kw, kb, out_dim, in_dim):
        bound = 1.0 / math.sqrt(in_dim)
        w = jax.random.uniform(kw, (out_dim, in_dim), minval=-bound, maxval=bound,
                               dtype=jnp.float32)
        b = jax.random.uniform(kb, (out_dim,), minval=-bound, maxval=bound,
                               dtype=jnp.float32)
        return w, b

    def mab_params(kit, dim_Q, dim_K, dim_V):
        wq, bq = lin_init(next(kit), next(kit), dim_V, dim_Q)
        wk, bk = lin_init(next(kit), next(kit), dim_V, dim_K)
        wv, bv = lin_init(next(kit), next(kit), dim_V, dim_K)
        wo, bo = lin_init(next(kit), next(kit), dim_V, dim_V)
        return dict(wq=wq, bq=bq, wk=wk, bk=bk, wv=wv, bv=bv, wo=wo, bo=bo)

    bound_i = math.sqrt(6.0 / (num_inds + dim_out))   # xavier_uniform_ for I
    I = jax.random.uniform(next(keys), (1, num_inds, dim_out),
                           minval=-bound_i, maxval=bound_i, dtype=jnp.float32)

    params = {
        "I": I,
        "mab0": mab_params(keys, dim_out, dim_in, dim_out),  # MABSINK(dim_out, dim_in, dim_out)
        "mab1": mab_params(keys, dim_in, dim_out, dim_out),  # MABSINK(dim_in, dim_out, dim_out)
    }

    # 1) Standalone MAB, f32 MXU, attention returned, forced TB=2
    #    (exercises the batch-grid index maps and the 3-D fallback layout).
    Y = jnp.broadcast_to(params["I"], (B, num_inds, dim_out))
    O0, A0 = mab_forward(Y, X, params["mab0"], num_heads=num_heads,
                         mxu_dtype=jnp.float32, return_attn=True, batch_tile=2)
    jax.block_until_ready((O0, A0))
    O0_ref, A0_ref = _reference_mab(Y, X, params["mab0"], num_heads)
    assert O0.shape == (B, num_inds, dim_out)
    assert A0.shape == (num_heads * B, num_inds, N)
    assert jnp.allclose(O0, O0_ref, atol=1e-2, rtol=1e-2)
    assert jnp.allclose(A0, A0_ref, atol=1e-2, rtol=1e-2)

    # 2) Padded / q-tiled path: Nq=260 > 256 -> padded to 384, TQ=128,
    #    q-grid of 3 steps, lane-dense flat input/output slabs.
    Bp, Nql, Nkl = 2, 260, 16
    p_big = mab_params(keys, dim_in, dim_in, dim_out)
    Qb = jax.random.normal(next(keys), (Bp, Nql, dim_in), dtype=jnp.float32)
    Kb = jax.random.normal(next(keys), (Bp, Nkl, dim_in), dtype=jnp.float32)
    O1, A1 = mab_forward(Qb, Kb, p_big, num_heads=num_heads,
                         mxu_dtype=jnp.float32, return_attn=True)
    jax.block_until_ready((O1, A1))
    O1_ref, A1_ref = _reference_mab(Qb, Kb, p_big, num_heads)
    assert O1.shape == (Bp, Nql, dim_out) and A1.shape == (num_heads * Bp, Nql, Nkl)
    assert jnp.allclose(O1, O1_ref, atol=1e-2, rtol=1e-2)
    assert jnp.allclose(A1, A1_ref, atol=1e-2, rtol=1e-2)

    # 3) Full ISABSINK forward, f32 MXU (tight check; A never written).
    out_f32 = isabsink_forward(X, params, num_heads=num_heads, mxu_dtype=jnp.float32)
    jax.block_until_ready(out_f32)
    out_ref = _reference_isab(X, params, num_heads)
    assert out_f32.shape == (B, N, dim_out)
    assert jnp.allclose(out_f32, out_ref, atol=1e-2, rtol=1e-2)

    # 4) Full ISABSINK forward with the default bf16 MXU weights (loose check —
    #    bf16 operand rounding compounds through two chained MABs).
    out_bf16 = isabsink_forward(X, params, num_heads=num_heads)
    jax.block_until_ready(out_bf16)
    assert out_bf16.shape == (B, N, dim_out)
    assert jnp.allclose(out_bf16, out_ref, atol=5e-2, rtol=5e-2)

    print("KERNEL_OK")
</pallas_src>

<mosaic_0001>
module attributes {stable_mosaic.version = 11 : i64} {
  func.func @_mab_kernel(%arg0: i32, %arg1: i32, %arg2: memref<2x8x32xf32, #tpu.memory_space<vmem>>, %arg3: memref<2x8x16xf32, #tpu.memory_space<vmem>>, %arg4: memref<32x32xf32, #tpu.memory_space<vmem>>, %arg5: memref<1x32xf32, #tpu.memory_space<vmem>>, %arg6: memref<16x64xf32, #tpu.memory_space<vmem>>, %arg7: memref<1x64xf32, #tpu.memory_space<vmem>>, %arg8: memref<32x32xf32, #tpu.memory_space<vmem>>, %arg9: memref<1x32xf32, #tpu.memory_space<vmem>>, %arg10: memref<2x8x32xf32, #tpu.memory_space<vmem>>, %arg11: memref<4x2x8x8xf32, #tpu.memory_space<vmem>>) attributes {dimension_semantics = [#tpu.dimension_semantics<parallel>, #tpu.dimension_semantics<parallel>], iteration_bounds = array<i64: 2, 1>, scalar_prefetch = 0 : i64, scratch_operands = 0 : i64, tpu.core_type = #tpu.core_type<tc>, window_params = [{transform_indices = @transform_0, window_bounds = array<i64: 2, 8, 32>}, {transform_indices = @transform_1, window_bounds = array<i64: 2, 8, 16>}, {pipeline_mode = #tpu.pipeline_mode<synchronous>, transform_indices = @transform_2, window_bounds = array<i64: 32, 32>}, {pipeline_mode = #tpu.pipeline_mode<synchronous>, transform_indices = @transform_3, window_bounds = array<i64: 1, 32>}, {pipeline_mode = #tpu.pipeline_mode<synchronous>, transform_indices = @transform_4, window_bounds = array<i64: 16, 64>}, {pipeline_mode = #tpu.pipeline_mode<synchronous>, transform_indices = @transform_5, window_bounds = array<i64: 1, 64>}, {pipeline_mode = #tpu.pipeline_mode<synchronous>, transform_indices = @transform_6, window_bounds = array<i64: 32, 32>}, {pipeline_mode = #tpu.pipeline_mode<synchronous>, transform_indices = @transform_7, window_bounds = array<i64: 1, 32>}, {transform_indices = @transform_8, window_bounds = array<i64: 2, 8, 32>}, {transform_indices = @transform_9, window_bounds = array<i64: 4, 2, 8, 8>}]} {
    %c0 = arith.constant 0 : index
    %c0_0 = arith.constant 0 : index
    %c0_1 = arith.constant 0 : index
    %0 = vector.load %arg2[%c0, %c0_0, %c0_1] : memref<2x8x32xf32, #tpu.memory_space<vmem>>, vector<2x8x32xf32>
    %1 = vector.shape_cast %0 : vector<2x8x32xf32> to vector<16x32xf32>
    %c0_2 = arith.constant 0 : index
    %c0_3 = arith.constant 0 : index
    %c0_4 = arith.constant 0 : index
    %2 = vector.load %arg3[%c0_2, %c0_3, %c0_4] : memref<2x8x16xf32, #tpu.memory_space<vmem>>, vector<2x8x16xf32>
    %3 = vector.shape_cast %2 : vector<2x8x16xf32> to vector<16x16xf32>
    %c0_5 = arith.constant 0 : index
    %c0_6 = arith.constant 0 : index
    %4 = vector.load %arg4[%c0_5, %c0_6] : memref<32x32xf32, #tpu.memory_space<vmem>>, vector<32x32xf32>
    %cst = arith.constant dense<0.000000e+00> : vector<16x32xf32>
    %5 = tpu.matmul %1, %4, %cst {dimension_numbers = #tpu.dot_dimension_numbers<[1], [0], [0], [1], [0, 0, 1, 1], [], []>} : vector<16x32xf32>, vector<32x32xf32>, vector<16x32xf32> -> vector<16x32xf32>
    %c0_7 = arith.constant 0 : index
    %c0_8 = arith.constant 0 : index
    %6 = vector.load %arg5[%c0_7, %c0_8] : memref<1x32xf32, #tpu.memory_space<vmem>>, vector<1x32xf32>
    %7 = vector.broadcast %6 : vector<1x32xf32> to vector<16x32xf32>
    %8 = arith.addf %5, %7 : vector<16x32xf32>
    %c0_9 = arith.constant 0 : index
    %c0_10 = arith.constant 0 : index
    %9 = vector.load %arg6[%c0_9, %c0_10] : memref<16x64xf32, #tpu.memory_space<vmem>>, vector<16x64xf32>
    %cst_11 = arith.constant dense<0.000000e+00> : vector<16x64xf32>
    %10 = tpu.matmul %3, %9, %cst_11 {dimension_numbers = #tpu.dot_dimension_numbers<[1], [0], [0], [1], [0, 0, 1, 1], [], []>} : vector<16x16xf32>, vector<16x64xf32>, vector<16x64xf32> -> vector<16x64xf32>
    %c0_12 = arith.constant 0 : index
    %c0_13 = arith.constant 0 : index
    %11 = vector.load %arg7[%c0_12, %c0_13] : memref<1x64xf32, #tpu.memory_space<vmem>>, vector<1x64xf32>
    %12 = vector.broadcast %11 : vector<1x64xf32> to vector<16x64xf32>
    %13 = arith.addf %10, %12 : vector<16x64xf32>
    %14 = vector.extract_strided_slice %8 {offsets = [0, 0], sizes = [16, 8], strides = [1, 1]} : vector<16x32xf32> to vector<16x8xf32>
    %15 = vector.extract_strided_slice %8 {offsets = [0, 8], sizes = [16, 8], strides = [1, 1]} : vector<16x32xf32> to vector<16x8xf32>
    %16 = vector.extract_strided_slice %8 {offsets = [0, 16], sizes = [16, 8], strides = [1, 1]} : vector<16x32xf32> to vector<16x8xf32>
    %17 = vector.extract_strided_slice %8 {offsets = [0, 24], sizes = [16, 8], strides = [1, 1]} : vector<16x32xf32> to vector<16x8xf32>
    %18 = vector.shape_cast %14 : vector<16x8xf32> to vector<1x16x8xf32>
    %19 = vector.shape_cast %15 : vector<16x8xf32> to vector<1x16x8xf32>
    %20 = vector.shape_cast %16 : vector<16x8xf32> to vector<1x16x8xf32>
    %21 = vector.shape_cast %17 : vector<16x8xf32> to vector<1x16x8xf32>
    %22 = tpu.concatenate %18, %19, %20, %21 in 0 : vector<1x16x8xf32>, vector<1x16x8xf32>, vector<1x16x8xf32>, vector<1x16x8xf32> -> vector<4x16x8xf32>
    %23 = vector.extract_strided_slice %13 {offsets = [0, 0], sizes = [16, 8], strides = [1, 1]} : vector<16x64xf32> to vector<16x8xf32>
    %24 = vector.extract_strided_slice %13 {offsets = [0, 8], sizes = [16, 8], strides = [1, 1]} : vector<16x64xf32> to vector<16x8xf32>
    %25 = vector.extract_strided_slice %13 {offsets = [0, 16], sizes = [16, 8], strides = [1, 1]} : vector<16x64xf32> to vector<16x8xf32>
    %26 = vector.extract_strided_slice %13 {offsets = [0, 24], sizes = [16, 8], strides = [1, 1]} : vector<16x64xf32> to vector<16x8xf32>
    %27 = vector.shape_cast %23 : vector<16x8xf32> to vector<1x16x8xf32>
    %28 = vector.shape_cast %24 : vector<16x8xf32> to vector<1x16x8xf32>
    %29 = vector.shape_cast %25 : vector<16x8xf32> to vector<1x16x8xf32>
    %30 = vector.shape_cast %26 : vector<16x8xf32> to vector<1x16x8xf32>
    %31 = tpu.concatenate %27, %28, %29, %30 in 0 : vector<1x16x8xf32>, vector<1x16x8xf32>, vector<1x16x8xf32>, vector<1x16x8xf32> -> vector<4x16x8xf32>
    %32 = vector.extract_strided_slice %13 {offsets = [0, 32], sizes = [16, 8], strides = [1, 1]} : vector<16x64xf32> to vector<16x8xf32>
    %33 = vector.extract_strided_slice %13 {offsets = [0, 40], sizes = [16, 8], strides = [1, 1]} : vector<16x64xf32> to vector<16x8xf32>
    %34 = vector.extract_strided_slice %13 {offsets = [0, 48], sizes = [16, 8], strides = [1, 1]} : vector<16x64xf32> to vector<16x8xf32>
    %35 = vector.extract_strided_slice %13 {offsets = [0, 56], sizes = [16, 8], strides = [1, 1]} : vector<16x64xf32> to vector<16x8xf32>
    %36 = vector.shape_cast %32 : vector<16x8xf32> to vector<1x16x8xf32>
    %37 = vector.shape_cast %33 : vector<16x8xf32> to vector<1x16x8xf32>
    %38 = vector.shape_cast %34 : vector<16x8xf32> to vector<1x16x8xf32>
    %39 = vector.shape_cast %35 : vector<16x8xf32> to vector<1x16x8xf32>
    %40 = tpu.concatenate %36, %37, %38, %39 in 0 : vector<1x16x8xf32>, vector<1x16x8xf32>, vector<1x16x8xf32>, vector<1x16x8xf32> -> vector<4x16x8xf32>
    %41 = vector.shape_cast %22 : vector<4x16x8xf32> to vector<8x8x8xf32>
    %42 = vector.shape_cast %31 : vector<4x16x8xf32> to vector<8x8x8xf32>
    %43 = vector.shape_cast %40 : vector<4x16x8xf32> to vector<8x8x8xf32>
    "tpu.trace_start"() <{level = 10 : i32, message = "bqd,bkd->bqk"}> : () -> ()
    %cst_14 = arith.constant dense<0.000000e+00> : vector<8x8x8xf32>
    %44 = tpu.matmul %41, %42, %cst_14 {dimension_numbers = #tpu.dot_dimension_numbers<[2], [2], [1], [1], [0, 0, 0, 1, 1, 1], [0], [0]>} : vector<8x8x8xf32>, vector<8x8x8xf32>, vector<8x8x8xf32> -> vector<8x8x8xf32>
    "tpu.trace_stop"() : () -> ()
    %cst_15 = arith.constant dense<0xFF800000> : vector<8x8xf32>
    %45 = vector.multi_reduction <maximumf>, %44, %cst_15 [2] : vector<8x8x8xf32> to vector<8x8xf32>
    %46 = vector.shape_cast %45 : vector<8x8xf32> to vector<8x8x1xf32>
    %47 = vector.broadcast %46 : vector<8x8x1xf32> to vector<8x8x8xf32>
    %48 = arith.subf %44, %47 : vector<8x8x8xf32>
    %49 = math.exp %48 : vector<8x8x8xf32>
    %cst_16 = arith.constant dense<0.000000e+00> : vector<8x8xf32>
    %50 = vector.multi_reduction <add>, %49, %cst_16 [2] : vector<8x8x8xf32> to vector<8x8xf32>
    %51 = vector.shape_cast %50 : vector<8x8xf32> to vector<8x8x1xf32>
    %52 = tpu.reciprocal %51 : vector<8x8x1xf32> -> vector<8x8x1xf32>
    %53 = vector.broadcast %52 : vector<8x8x1xf32> to vector<8x8x8xf32>
    %54 = arith.mulf %49, %53 : vector<8x8x8xf32>
    %55 = vector.shape_cast %54 : vector<8x8x8xf32> to vector<4x2x8x8xf32>
    %c0_17 = arith.constant 0 : index
    %c0_18 = arith.constant 0 : index
    %c0_19 = arith.constant 0 : index
    %c0_20 = arith.constant 0 : index
    %56 = vector.load %arg11[%c0_17, %c0_18, %c0_19, %c0_20] : memref<4x2x8x8xf32, #tpu.memory_space<vmem>>, vector<4x2x8x8xf32>
    tpu.vector_store %arg11[%c0_17, %c0_18, %c0_19, %c0_20], %55 {strides = array<i32>} : memref<4x2x8x8xf32, #tpu.memory_space<vmem>>, vector<4x2x8x8xf32>,
    "tpu.trace_start"() <{level = 10 : i32, message = "bqk,bkd->bqd"}> : () -> ()
    %cst_21 = arith.constant dense<0.000000e+00> : vector<8x8x8xf32>
    %57 = tpu.matmul %54, %43, %cst_21 {dimension_numbers = #tpu.dot_dimension_numbers<[2], [1], [1], [2], [0, 0, 0, 1, 1, 2], [0], [0]>} : vector<8x8x8xf32>, vector<8x8x8xf32>, vector<8x8x8xf32> -> vector<8x8x8xf32>
    "tpu.trace_stop"() : () -> ()
    %58 = vector.shape_cast %57 : vector<8x8x8xf32> to vector<4x16x8xf32>
    %59 = vector.extract_strided_slice %58 {offsets = [0, 0, 0], sizes = [1, 16, 8], strides = [1, 1, 1]} : vector<4x16x8xf32> to vector<1x16x8xf32>
    %60 = vector.shape_cast %59 : vector<1x16x8xf32> to vector<16x8xf32>
    %61 = vector.extract_strided_slice %58 {offsets = [1, 0, 0], sizes = [1, 16, 8], strides = [1, 1, 1]} : vector<4x16x8xf32> to vector<1x16x8xf32>
    %62 = vector.shape_cast %61 : vector<1x16x8xf32> to vector<16x8xf32>
    %63 = vector.extract_strided_slice %58 {offsets = [2, 0, 0], sizes = [1, 16, 8], strides = [1, 1, 1]} : vector<4x16x8xf32> to vector<1x16x8xf32>
    %64 = vector.shape_cast %63 : vector<1x16x8xf32> to vector<16x8xf32>
    %65 = vector.extract_strided_slice %58 {offsets = [3, 0, 0], sizes = [1, 16, 8], strides = [1, 1, 1]} : vector<4x16x8xf32> to vector<1x16x8xf32>
    %66 = vector.shape_cast %65 : vector<1x16x8xf32> to vector<16x8xf32>
    %67 = tpu.concatenate %60, %62, %64, %66 in 1 : vector<16x8xf32>, vector<16x8xf32>, vector<16x8xf32>, vector<16x8xf32> -> vector<16x32xf32>
    %68 = arith.addf %8, %67 : vector<16x32xf32>
    %c0_22 = arith.constant 0 : index
    %c0_23 = arith.constant 0 : index
    %69 = vector.load %arg8[%c0_22, %c0_23] : memref<32x32xf32, #tpu.memory_space<vmem>>, vector<32x32xf32>
    %cst_24 = arith.constant dense<0.000000e+00> : vector<16x32xf32>
    %70 = tpu.matmul %68, %69, %cst_24 {dimension_numbers = #tpu.dot_dimension_numbers<[1], [0], [0], [1], [0, 0, 1, 1], [], []>} : vector<16x32xf32>, vector<32x32xf32>, vector<16x32xf32> -> vector<16x32xf32>
    %c0_25 = arith.constant 0 : index
    %c0_26 = arith.constant 0 : index
    %71 = vector.load %arg9[%c0_25, %c0_26] : memref<1x32xf32, #tpu.memory_space<vmem>>, vector<1x32xf32>
    %72 = vector.broadcast %71 : vector<1x32xf32> to vector<16x32xf32>
    %73 = arith.addf %70, %72 : vector<16x32xf32>
    %cst_27 = arith.constant 0.000000e+00 : f32
    %74 = vector.broadcast %cst_27 : f32 to vector<16x32xf32>
    %75 = arith.maximumf %73, %74 : vector<16x32xf32>
    %76 = arith.addf %68, %75 : vector<16x32xf32>
    %77 = vector.shape_cast %76 : vector<16x32xf32> to vector<2x8x32xf32>
    %c0_28 = arith.constant 0 : index
    %c0_29 = arith.constant 0 : index
    %c0_30 = arith.constant 0 : index
    %78 = vector.load %arg10[%c0_28, %c0_29, %c0_30] : memref<2x8x32xf32, #tpu.memory_space<vmem>>, vector<2x8x32xf32>
    tpu.vector_store %arg10[%c0_28, %c0_29, %c0_30], %77 {strides = array<i32>} : memref<2x8x32xf32, #tpu.memory_space<vmem>>, vector<2x8x32xf32>,
    return
  }
  func.func @transform_0(%arg0: i32, %arg1: i32) -> (i32, i32, i32) {
    %c0_i32 = arith.constant 0 : i32
    %c0_i32_0 = arith.constant 0 : i32
    return %arg0, %arg1, %c0_i32 : i32, i32, i32
  }
  func.func @transform_1(%arg0: i32, %arg1: i32) -> (i32, i32, i32) {
    %c0_i32 = arith.constant 0 : i32
    %c0_i32_0 = arith.constant 0 : i32
    %c0_i32_1 = arith.constant 0 : i32
    return %arg0, %c0_i32, %c0_i32_0 : i32, i32, i32
  }
  func.func @transform_2(%arg0: i32, %arg1: i32) -> (i32, i32) {
    %c0_i32 = arith.constant 0 : i32
    %c0_i32_0 = arith.constant 0 : i32
    %c0_i32_1 = arith.constant 0 : i32
    return %c0_i32, %c0_i32_0 : i32, i32
  }
  func.func @transform_3(%arg0: i32, %arg1: i32) -> (i32, i32) {
    %c0_i32 = arith.constant 0 : i32
    %c0_i32_0 = arith.constant 0 : i32
    %c0_i32_1 = arith.constant 0 : i32
    return %c0_i32, %c0_i32_0 : i32, i32
  }
  func.func @transform_4(%arg0: i32, %arg1: i32) -> (i32, i32) {
    %c0_i32 = arith.constant 0 : i32
    %c0_i32_0 = arith.constant 0 : i32
    %c0_i32_1 = arith.constant 0 : i32
    return %c0_i32, %c0_i32_0 : i32, i32
  }
  func.func @transform_5(%arg0: i32, %arg1: i32) -> (i32, i32) {
    %c0_i32 = arith.constant 0 : i32
    %c0_i32_0 = arith.constant 0 : i32
    %c0_i32_1 = arith.constant 0 : i32
    return %c0_i32, %c0_i32_0 : i32, i32
  }
  func.func @transform_6(%arg0: i32, %arg1: i32) -> (i32, i32) {
    %c0_i32 = arith.constant 0 : i32
    %c0_i32_0 = arith.constant 0 : i32
    %c0_i32_1 = arith.constant 0 : i32
    return %c0_i32, %c0_i32_0 : i32, i32
  }
  func.func @transform_7(%arg0: i32, %arg1: i32) -> (i32, i32) {
    %c0_i32 = arith.constant 0 : i32
    %c0_i32_0 = arith.constant 0 : i32
    %c0_i32_1 = arith.constant 0 : i32
    return %c0_i32, %c0_i32_0 : i32, i32
  }
  func.func @transform_8(%arg0: i32, %arg1: i32) -> (i32, i32, i32) {
    %c0_i32 = arith.constant 0 : i32
    %c0_i32_0 = arith.constant 0 : i32
    return %arg0, %arg1, %c0_i32 : i32, i32, i32
  }
  func.func @transform_9(%arg0: i32, %arg1: i32) -> (i32, i32, i32, i32) {
    %c0_i32 = arith.constant 0 : i32
    %c0_i32_0 = arith.constant 0 : i32
    %c0_i32_1 = arith.constant 0 : i32
    return %c0_i32, %arg0, %arg1, %c0_i32_0 : i32, i32, i32, i32
  }
}

</mosaic_0001>

<llo_original>
// kernel: tpu_custom_call.1
$region0: #{tpu_custom_call.1}
  #allocation0 [shape = 'u32[]', space=smem, size = 0x4, offset = 0x4, fixed_abs, tag = 'smem constant byte address 0x4 - core index']
  #allocation1 [shape = 'u32[144,128]{1,0:T(1,128)}', space=vmem, size = 0x12000, scoped, tag = 'internal scratch']
  #allocation14 [shape = 's32[]', space=sflag, size = 0x4, offset = 0, fixed_abs, tag = 'sflag constant byte address 0x0 - dummy sync flag']
  %s0 = inlined_call_operand.hbm [shape: f32[4,8,32], index: 0, kind: input, shape index: {}]
  %s1 = inlined_call_operand.hbm [shape: f32[4,8,16], index: 1, kind: input, shape index: {}]
  %s2 = inlined_call_operand.hbm [shape: f32[32,32], index: 2, kind: input, shape index: {}]
  %s3 = inlined_call_operand.vmem [shape: f32[1,32], index: 3, kind: input, shape index: {}]
  %s4 = inlined_call_operand.hbm [shape: f32[16,64], index: 4, kind: input, shape index: {}]
  %s5 = inlined_call_operand.vmem [shape: f32[1,64], index: 5, kind: input, shape index: {}]
  %s6 = inlined_call_operand.hbm [shape: f32[32,32], index: 6, kind: input, shape index: {}]
  %s7 = inlined_call_operand.vmem [shape: f32[1,32], index: 7, kind: input, shape index: {}]
  %s8 = inlined_call_operand.hbm [shape: f32[4,8,32], index: 8, kind: output, shape index: {0}]
  %s9 = inlined_call_operand.hbm [shape: f32[4,4,8,8], index: 9, kind: output, shape index: {1}]
  %10 = xla_tuple %s8, %s9
  %s11 = sld [smem:[#allocation0]]
  $region93: #{tpu_custom_call.1} parent=0
    _
  %s13 = ssub.s32 1, %s11
  %s14 = scalar_select 0, %s13, %s11
  $region1: #{tpu_custom_call.1} parent=0
    #allocation2 [shape = 'u8[16384]{0}', space=vmem, size = 0x4000, scoped, tag = 'input window, operand 0']
    #allocation3 [shape = 's32[2]{0}', space=sflag, size = 0x8, scoped, tag = 'scoped memory for tpu_custom_call.1']
    #allocation4 [shape = 's32[2]{0}', space=sflag, size = 0x8, scoped, tag = 'scoped memory for tpu_custom_call.1']
    #allocation5 [shape = 'u8[16384]{0}', space=vmem, size = 0x4000, scoped, tag = 'input window, operand 1']
    #allocation6 [shape = 's32[2]{0}', space=sflag, size = 0x8, scoped, tag = 'scoped memory for tpu_custom_call.1']
    #allocation7 [shape = 'u8[16384]{0}', space=vmem, size = 0x4000, scoped, tag = 'input window, operand 2, single buffered']
    #allocation8 [shape = 'u8[8192]{0}', space=vmem, size = 0x2000, scoped, tag = 'input window, operand 4, single buffered']
    #allocation9 [shape = 's32[1]{0}', space=sflag, size = 0x4, scoped, tag = 'scoped memory for tpu_custom_call.1']
    #allocation10 [shape = 'u8[16384]{0}', space=vmem, size = 0x4000, scoped, tag = 'input window, operand 6, single buffered']
    #allocation11 [shape = 'u8[16384]{0}', space=vmem, size = 0x4000, scoped, tag = 'output window, operand 0']
    #allocation12 [shape = 'u8[65536]{0}', space=vmem, size = 0x10000, scoped, tag = 'output window, operand 1']
    #allocation13 [shape = 's32[2]{0}', space=sflag, size = 0x8, scoped, tag = 'scoped memory for tpu_custom_call.1']
    %15 = vsyncpa [#allocation3], 0
    %s16 = scalar_lea.sflag [#allocation3], 1
    %17 = vsyncpa %s16, 0
    %18 = vsyncpa [#allocation6], 0
    %s19 = scalar_lea.sflag [#allocation6], 1
    %20 = vsyncpa %s19, 0
    %21 = vsyncpa [#allocation9], 0
    %22 = vsyncpa [#allocation4], 0
    %s23 = scalar_lea.sflag [#allocation4], 1
    %24 = vsyncpa %s23, 0
    %25 = vsyncpa [#allocation13], 0
    %s26 = scalar_lea.sflag [#allocation13], 1
    %27 = vsyncpa %s26, 0
    loop: start=0, step=1, limit=4
    $region2: #{tpu_custom_call.1} parent=1 // loop_pre_header
      _
    $region3: #{tpu_custom_call.1} parent=1 // loop_header
      %s29 = sphi 0, %s33
      %p30 = scmp.ge.s32.totalorder %s29, 4
      %s36 = sphi 0, %s48
      %s37 = sphi 0, %s44
      %s38 = sphi 0, %s36
      %s39 = sphi 0, %s37
      %s40 = sphi 0, %s38
      %s41 = sphi 0, %s39
      %s53 = sphi 0, %s55
      %s56 = sphi 0, %s53
      %s57 = sphi 0, %s56
      %s73 = sphi 0, %s57
      %s79 = sphi 0, %s81
      %s82 = sphi 0, %s79
      %s83 = sphi 0, %s82
      %s99 = sphi 0, %s83
      %s103 = sphi 0, %s103
      %s105 = sphi 0, %s103
      %s106 = sphi 0, %s105
      %s120 = sphi 0, %s106
      %s124 = sphi 0, %s124
      %s126 = sphi 0, %s124
      %s127 = sphi 0, %s126
      %s141 = sphi 0, %s127
      %s145 = sphi 0, %s145
      %s147 = sphi 0, %s145
      %s148 = sphi 0, %s147
      %s162 = sphi 0, %s148
      %s166 = sphi 0, %s166
      %s168 = sphi 0, %s166
      %s169 = sphi 0, %s168
      %s183 = sphi 0, %s169
      %s187 = sphi 0, %s187
      %s189 = sphi 0, %s187
      %s190 = sphi 0, %s189
      %s204 = sphi 0, %s190
      %s208 = sphi 0, %s208
      %s210 = sphi 0, %s208
      %s211 = sphi 0, %s210
      %s225 = sphi 0, %s211
      %s233 = sphi 0, %s235
      %s236 = sphi 0, %s233
      %s237 = sphi 0, %s236
      %s253 = sphi 0, %s237
      %s261 = sphi 0, %s263
      %s264 = sphi 0, %s261
      %s265 = sphi 0, %s264
      %s281 = sphi 0, %s265
    $region4: #{tpu_custom_call.1} parent=1 // loop_header_branch
      %32 = sbr.rel (%p30) target = $region8
    $region5: #{tpu_custom_call.1} parent=1 // loop_body
      %s34 = ssub.s32 %s29, 1
      %s35 = ssub.s32 %s29, 2
      %s42 = sadd.s32 1, %s37
      %p43 = scmp.ge.s32.totalorder %s42, 1
      %s44 = scalar_select %p43, 0, %s42
      %s45 = sadd.s32 1, %s36
      %s46 = scalar_select %p43, %s45, %s36
      %p47 = scmp.ge.s32.totalorder %s46, 2
      %s48 = scalar_select %p47, 0, %s46
      %s49 = ssub.s32 %s36, %s48
      %s50 = ssub.s32 %s37, %s44
      %s51 = sor.u32 %s49, %s50
      %p52 = scmp.eq.s32.totalorder %s51, 0
      %s54 = sadd.s32 %s53, 1
      %s55 = scalar_select %p52, %s53, %s54
      %p58 = pneg %p52
      %p59 = scmp.eq.s32.totalorder %s29, 1
      %p60 = por %p58, %p59
      %p61 = scmp.ne.s32.totalorder %s53, %s56
      %p62 = scmp.eq.s32.totalorder %s29, 0
      %p63 = por %p61, %p62
      %p64 = scmp.ne.s32.totalorder %s53, %s56
      %p65 = scmp.eq.s32.totalorder %s34, 1
      %p66 = por %p64, %p65
      %p67 = scmp.ne.s32.totalorder %s56, %s57
      %p68 = scmp.eq.s32.totalorder %s34, 0
      %p69 = por %p67, %p68
      %p70 = scmp.ne.s32.totalorder %s56, %s57
      %p71 = scmp.eq.s32.totalorder %s35, 1
      %p72 = por %p70, %p71
      %p74 = scmp.ne.s32.totalorder %s57, %s73
      %p75 = scmp.eq.s32.totalorder %s35, 0
      %p76 = por %p74, %p75
      %s77 = ssub.s32 %s36, %s48
      %p78 = scmp.eq.s32.totalorder %s77, 0
      %s80 = sadd.s32 %s79, 1
      %s81 = scalar_select %p78, %s79, %s80
      %p84 = pneg %p78
      %p85 = scmp.eq.s32.totalorder %s29, 1
      %p86 = por %p84, %p85
      %p87 = scmp.ne.s32.totalorder %s79, %s82
      %p88 = scmp.eq.s32.totalorder %s29, 0
      %p89 = por %p87, %p88
      %p90 = scmp.ne.s32.totalorder %s79, %s82
      %p91 = scmp.eq.s32.totalorder %s34, 1
      %p92 = por %p90, %p91
      %p93 = scmp.ne.s32.totalorder %s82, %s83
      %p94 = scmp.eq.s32.totalorder %s34, 0
      %p95 = por %p93, %p94
      %p96 = scmp.ne.s32.totalorder %s82, %s83
      %p97 = scmp.eq.s32.totalorder %s35, 1
      %p98 = por %p96, %p97
      %p100 = scmp.ne.s32.totalorder %s83, %s99
      %p101 = scmp.eq.s32.totalorder %s35, 0
      %p102 = por %p100, %p101
      %s104 = sadd.s32 %s103, 1
      %p107 = scmp.eq.s32.totalorder %s29, 1
      %p108 = scmp.ne.s32.totalorder %s103, %s105
      %p109 = scmp.eq.s32.totalorder %s29, 0
      %p110 = por %p108, %p109
      %p111 = scmp.ne.s32.totalorder %s103, %s105
      %p112 = scmp.eq.s32.totalorder %s34, 1
      %p113 = por %p111, %p112
      %p114 = scmp.ne.s32.totalorder %s105, %s106
      %p115 = scmp.eq.s32.totalorder %s34, 0
      %p116 = por %p114, %p115
      %p117 = scmp.ne.s32.totalorder %s105, %s106
      %p118 = scmp.eq.s32.totalorder %s35, 1
      %p119 = por %p117, %p118
      %p121 = scmp.ne.s32.totalorder %s106, %s120
      %p122 = scmp.eq.s32.totalorder %s35, 0
      %p123 = por %p121, %p122
      %s125 = sadd.s32 %s124, 1
      %p128 = scmp.eq.s32.totalorder %s29, 1
      %p129 = scmp.ne.s32.totalorder %s124, %s126
      %p130 = scmp.eq.s32.totalorder %s29, 0
      %p131 = por %p129, %p130
      %p132 = scmp.ne.s32.totalorder %s124, %s126
      %p133 = scmp.eq.s32.totalorder %s34, 1
      %p134 = por %p132, %p133
      %p135 = scmp.ne.s32.totalorder %s126, %s127
      %p136 = scmp.eq.s32.totalorder %s34, 0
      %p137 = por %p135, %p136
      %p138 = scmp.ne.s32.totalorder %s126, %s127
      %p139 = scmp.eq.s32.totalorder %s35, 1
      %p140 = por %p138, %p139
      %p142 = scmp.ne.s32.totalorder %s127, %s141
      %p143 = scmp.eq.s32.totalorder %s35, 0
      %p144 = por %p142, %p143
      %s146 = sadd.s32 %s145, 1
      %p149 = scmp.eq.s32.totalorder %s29, 1
      %p150 = scmp.ne.s32.totalorder %s145, %s147
      %p151 = scmp.eq.s32.totalorder %s29, 0
      %p152 = por %p150, %p151
      %p153 = scmp.ne.s32.totalorder %s145, %s147
      %p154 = scmp.eq.s32.totalorder %s34, 1
      %p155 = por %p153, %p154
      %p156 = scmp.ne.s32.totalorder %s147, %s148
      %p157 = scmp.eq.s32.totalorder %s34, 0
      %p158 = por %p156, %p157
      %p159 = scmp.ne.s32.totalorder %s147, %s148
      %p160 = scmp.eq.s32.totalorder %s35, 1
      %p161 = por %p159, %p160
      %p163 = scmp.ne.s32.totalorder %s148, %s162
      %p164 = scmp.eq.s32.totalorder %s35, 0
      %p165 = por %p163, %p164
      %s167 = sadd.s32 %s166, 1
      %p170 = scmp.eq.s32.totalorder %s29, 1
      %p171 = scmp.ne.s32.totalorder %s166, %s168
      %p172 = scmp.eq.s32.totalorder %s29, 0
      %p173 = por %p171, %p172
      %p174 = scmp.ne.s32.totalorder %s166, %s168
      %p175 = scmp.eq.s32.totalorder %s34, 1
      %p176 = por %p174, %p175
      %p177 = scmp.ne.s32.totalorder %s168, %s169
      %p178 = scmp.eq.s32.totalorder %s34, 0
      %p179 = por %p177, %p178
      %p180 = scmp.ne.s32.totalorder %s168, %s169
      %p181 = scmp.eq.s32.totalorder %s35, 1
      %p182 = por %p180, %p181
      %p184 = scmp.ne.s32.totalorder %s169, %s183
      %p185 = scmp.eq.s32.totalorder %s35, 0
      %p186 = por %p184, %p185
      %s188 = sadd.s32 %s187, 1
      %p191 = scmp.eq.s32.totalorder %s29, 1
      %p192 = scmp.ne.s32.totalorder %s187, %s189
      %p193 = scmp.eq.s32.totalorder %s29, 0
      %p194 = por %p192, %p193
      %p195 = scmp.ne.s32.totalorder %s187, %s189
      %p196 = scmp.eq.s32.totalorder %s34, 1
      %p197 = por %p195, %p196
      %p198 = scmp.ne.s32.totalorder %s189, %s190
      %p199 = scmp.eq.s32.totalorder %s34, 0
      %p200 = por %p198, %p199
      %p201 = scmp.ne.s32.totalorder %s189, %s190
      %p202 = scmp.eq.s32.totalorder %s35, 1
      %p203 = por %p201, %p202
      %p205 = scmp.ne.s32.totalorder %s190, %s204
      %p206 = scmp.eq.s32.totalorder %s35, 0
      %p207 = por %p205, %p206
      %s209 = sadd.s32 %s208, 1
      %p212 = scmp.eq.s32.totalorder %s29, 1
      %p213 = scmp.ne.s32.totalorder %s208, %s210
      %p214 = scmp.eq.s32.totalorder %s29, 0
      %p215 = por %p213, %p214
      %p216 = scmp.ne.s32.totalorder %s208, %s210
      %p217 = scmp.eq.s32.totalorder %s34, 1
      %p218 = por %p216, %p217
      %p219 = scmp.ne.s32.totalorder %s210, %s211
      %p220 = scmp.eq.s32.totalorder %s34, 0
      %p221 = por %p219, %p220
      %p222 = scmp.ne.s32.totalorder %s210, %s211
      %p223 = scmp.eq.s32.totalorder %s35, 1
      %p224 = por %p222, %p223
      %p226 = scmp.ne.s32.totalorder %s211, %s225
      %p227 = scmp.eq.s32.totalorder %s35, 0
      %p228 = por %p226, %p227
      %s229 = ssub.s32 %s36, %s48
      %s230 = ssub.s32 %s37, %s44
      %s231 = sor.u32 %s229, %s230
      %p232 = scmp.eq.s32.totalorder %s231, 0
      %s234 = sadd.s32 %s233, 1
      %s235 = scalar_select %p232, %s233, %s234
      %p238 = pneg %p232
      %p239 = scmp.eq.s32.totalorder %s29, 1
      %p240 = por %p238, %p239
      %p241 = scmp.ne.s32.totalorder %s233, %s236
      %p242 = scmp.eq.s32.totalorder %s29, 0
      %p243 = por %p241, %p242
      %p244 = scmp.ne.s32.totalorder %s233, %s236
      %p245 = scmp.eq.s32.totalorder %s34, 1
      %p246 = por %p244, %p245
      %p247 = scmp.ne.s32.totalorder %s236, %s237
      %p248 = scmp.eq.s32.totalorder %s34, 0
      %p249 = por %p247, %p248
      %p250 = scmp.ne.s32.totalorder %s236, %s237
      %p251 = scmp.eq.s32.totalorder %s35, 1
      %p252 = por %p250, %p251
      %p254 = scmp.ne.s32.totalorder %s237, %s253
      %p255 = scmp.eq.s32.totalorder %s35, 0
      %p256 = por %p254, %p255
      %s257 = ssub.s32 %s36, %s48
      %s258 = ssub.s32 %s37, %s44
      %s259 = sor.u32 %s257, %s258
      %p260 = scmp.eq.s32.totalorder %s259, 0
      %s262 = sadd.s32 %s261, 1
      %s263 = scalar_select %p260, %s261, %s262
      %p266 = pneg %p260
      %p267 = scmp.eq.s32.totalorder %s29, 1
      %p268 = por %p266, %p267
      %p269 = scmp.ne.s32.totalorder %s261, %s264
      %p270 = scmp.eq.s32.totalorder %s29, 0
      %p271 = por %p269, %p270
      %p272 = scmp.ne.s32.totalorder %s261, %s264
      %p273 = scmp.eq.s32.totalorder %s34, 1
      %p274 = por %p272, %p273
      %p275 = scmp.ne.s32.totalorder %s264, %s265
      %p276 = scmp.eq.s32.totalorder %s34, 0
      %p277 = por %p275, %p276
      %p278 = scmp.ne.s32.totalorder %s264, %s265
      %p279 = scmp.eq.s32.totalorder %s35, 1
      %p280 = por %p278, %p279
      %p282 = scmp.ne.s32.totalorder %s265, %s281
      %p283 = scmp.eq.s32.totalorder %s35, 0
      %p284 = por %p282, %p283
      %p285 = scmp.le.s32.totalorder 1, %s29
      %p286 = scmp.lt.s32.totalorder %s29, 3
      %p287 = pnand %p285, %p286
      %p288 = pneg %p287
      // Predicated region
      $region9: #{tpu_custom_call.1} parent=5 // pred_check
        _
      $region10: #{tpu_custom_call.1} parent=5 // pred_check_branch
        %290 = sbr.rel (%p287) target = $region12
      $region11: #{tpu_custom_call.1} parent=5 // pred_region
        %s291 = ssub.s32 %s29, 1
        // Predicated region
        $region13: #{tpu_custom_call.1} parent=11 // pred_check
          %p292 = pneg %p116
        $region14: #{tpu_custom_call.1} parent=11 // pred_check_branch
          %294 = sbr.rel (%p292) target = $region16
        $region15: #{tpu_custom_call.1} parent=11 // pred_region
          %s296 = ssub.s32 512, 512
          %297 = vsyncadd [#allocation6], %s296
          %s298 = sshll.u32 [#allocation7], 4
          %s299 = int_to_ptr.vmem [resolvable:$true] %s298
          %304 = dma.hbm_to_vmem [thread:$0]  %s2, 512, %s299, [#allocation6], 128, 128, 8
        $region16: #{tpu_custom_call.1} parent=11 // pred_fallthru
          _
        // Predicated region
        $region17: #{tpu_custom_call.1} parent=11 // pred_check
          %p305 = pneg %p137
        $region18: #{tpu_custom_call.1} parent=11 // pred_check_branch
          %307 = sbr.rel (%p305) target = $region20
        $region19: #{tpu_custom_call.1} parent=11 // pred_region
          _
        $region20: #{tpu_custom_call.1} parent=11 // pred_fallthru
          _
        // Predicated region
        $region21: #{tpu_custom_call.1} parent=11 // pred_check
          %p308 = pneg %p158
        $region22: #{tpu_custom_call.1} parent=11 // pred_check_branch
          %310 = sbr.rel (%p308) target = $region24
        $region23: #{tpu_custom_call.1} parent=11 // pred_region
          %s312 = ssub.s32 256, 256
          %313 = vsyncadd [#allocation9], %s312
          %s314 = sshll.u32 [#allocation8], 4
          %s315 = int_to_ptr.vmem [resolvable:$true] %s314
          %320 = dma.hbm_to_vmem [thread:$0]  %s4, 256, %s315, [#allocation9], 128, 128, 8
        $region24: #{tpu_custom_call.1} parent=11 // pred_fallthru
          _
        // Predicated region
        $region25: #{tpu_custom_call.1} parent=11 // pred_check
          %p321 = pneg %p179
        $region26: #{tpu_custom_call.1} parent=11 // pred_check_branch
          %323 = sbr.rel (%p321) target = $region28
        $region27: #{tpu_custom_call.1} parent=11 // pred_region
          _
        $region28: #{tpu_custom_call.1} parent=11 // pred_fallthru
          _
        // Predicated region
        $region29: #{tpu_custom_call.1} parent=11 // pred_check
          %p324 = pneg %p200
        $region30: #{tpu_custom_call.1} parent=11 // pred_check_branch
          %326 = sbr.rel (%p324) target = $region32
        $region31: #{tpu_custom_call.1} parent=11 // pred_region
          %s328 = ssub.s32 512, 512
          %329 = vsyncadd [#allocation9], %s328
          %s330 = sshll.u32 [#allocation10], 4
          %s331 = int_to_ptr.vmem [resolvable:$true] %s330
          %336 = dma.hbm_to_vmem [thread:$0]  %s6, 512, %s331, [#allocation9], 128, 128, 8
        $region32: #{tpu_custom_call.1} parent=11 // pred_fallthru
          _
        // Predicated region
        $region33: #{tpu_custom_call.1} parent=11 // pred_check
          %p337 = pneg %p221
        $region34: #{tpu_custom_call.1} parent=11 // pred_check_branch
          %339 = sbr.rel (%p337) target = $region36
        $region35: #{tpu_custom_call.1} parent=11 // pred_region
          _
        $region36: #{tpu_custom_call.1} parent=11 // pred_fallthru
          _
      $region12: #{tpu_custom_call.1} parent=5 // pred_fallthru
        _
      %p340 = scmp.lt.s32.totalorder %s29, 2
      // Predicated region
      $region37: #{tpu_custom_call.1} parent=5 // pred_check
        %p341 = pneg %p340
      $region38: #{tpu_custom_call.1} parent=5 // pred_check_branch
        %343 = sbr.rel (%p341) target = $region40
      $region39: #{tpu_custom_call.1} parent=5 // pred_region
        // Predicated region
        $region41: #{tpu_custom_call.1} parent=39 // pred_check
          %p344 = pneg %p63
        $region42: #{tpu_custom_call.1} parent=39 // pred_check_branch
          %346 = sbr.rel (%p344) target = $region44
        $region43: #{tpu_custom_call.1} parent=39 // pred_region
          %s347 = sand.u32 %s53, 1
          %s348 = scalar_lea.sflag [#allocation3], %s347
          %s349 = sand.u32 %s53, 1
          %s350 = smul.addr %s349, 16
          %s351 = scalar_lea.vmem [#allocation2], %s350
          %s352 = smul.u32 2, %s36
          %s354 = ssub.s32 256, 256
          %355 = vsyncadd %s348, %s354
          %s356 = sadd.s32 %s37, %s352
          %s357 = smul.addr %s356, 128
          %s358 = scalar_lea.hbm %s0, %s357
          %s359 = sshll.u32 %s351, 4
          %s360 = int_to_ptr.vmem [resolvable:$true] %s359
          %365 = dma.hbm_to_vmem [thread:$0]  %s358, 256, %s360, %s348, 128, 128, 8
        $region44: #{tpu_custom_call.1} parent=39 // pred_fallthru
          _
        // Predicated region
        $region45: #{tpu_custom_call.1} parent=39 // pred_check
          %p366 = pneg %p89
        $region46: #{tpu_custom_call.1} parent=39 // pred_check_branch
          %368 = sbr.rel (%p366) target = $region48
        $region47: #{tpu_custom_call.1} parent=39 // pred_region
          %s369 = sand.u32 %s29, 1
          %s370 = scalar_lea.sflag [#allocation6], %s369
          %s371 = sand.u32 %s79, 1
          %s372 = smul.addr %s371, 16
          %s373 = scalar_lea.vmem [#allocation5], %s372
          %s374 = smul.u32 2, %s36
          %s376 = ssub.s32 256, 256
          %377 = vsyncadd %s370, %s376
          %s378 = smul.addr %s374, 128
          %s379 = scalar_lea.hbm %s1, %s378
          %s380 = sshll.u32 %s373, 4
          %s381 = int_to_ptr.vmem [resolvable:$true] %s380
          %386 = dma.hbm_to_vmem [thread:$0]  %s379, 256, %s381, %s370, 128, 128, 8
        $region48: #{tpu_custom_call.1} parent=39 // pred_fallthru
          _
      $region40: #{tpu_custom_call.1} parent=5 // pred_fallthru
        _
      %p387 = scmp.le.s32.totalorder 1, %s29
      %p388 = scmp.lt.s32.totalorder %s29, 3
      %p389 = pnand %p387, %p388
      %p390 = pneg %p389
      // Predicated region
      $region49: #{tpu_custom_call.1} parent=5 // pred_check
        _
      $region50: #{tpu_custom_call.1} parent=5 // pred_check_branch
        %392 = sbr.rel (%p389) target = $region52
      $region51: #{tpu_custom_call.1} parent=5 // pred_region
        %s393 = ssub.s32 %s29, 1
        %s394 = sand.u32 %s56, 1
        %s395 = scalar_lea.sflag [#allocation3], %s394
        %s396 = sand.u32 %s56, 1
        %s397 = smul.addr %s396, 16
        %s398 = scalar_lea.vmem [#allocation2], %s397
        // Predicated region
        $region53: #{tpu_custom_call.1} parent=51 // pred_check
          %p399 = pneg %p69
        $region54: #{tpu_custom_call.1} parent=51 // pred_check_branch
          %401 = sbr.rel (%p399) target = $region56
        $region55: #{tpu_custom_call.1} parent=51 // pred_region
          %402 = dma.done %s395, 256
        $region56: #{tpu_custom_call.1} parent=51 // pred_fallthru
          _
        %s403 = sand.u32 %s34, 1
        %s404 = scalar_lea.sflag [#allocation6], %s403
        %s405 = sand.u32 %s82, 1
        %s406 = smul.addr %s405, 16
        %s407 = scalar_lea.vmem [#allocation5], %s406
        // Predicated region
        $region57: #{tpu_custom_call.1} parent=51 // pred_check
          %p408 = pneg %p95
        $region58: #{tpu_custom_call.1} parent=51 // pred_check_branch
          %410 = sbr.rel (%p408) target = $region60
        $region59: #{tpu_custom_call.1} parent=51 // pred_region
          %411 = dma.done %s404, 256
        $region60: #{tpu_custom_call.1} parent=51 // pred_fallthru
          _
        // Predicated region
        $region61: #{tpu_custom_call.1} parent=51 // pred_check
          %p412 = pneg %p116
        $region62: #{tpu_custom_call.1} parent=51 // pred_check_branch
          %414 = sbr.rel (%p412) target = $region64
        $region63: #{tpu_custom_call.1} parent=51 // pred_region
          %415 = dma.done [#allocation6], 512
        $region64: #{tpu_custom_call.1} parent=51 // pred_fallthru
          _
        // Predicated region
        $region65: #{tpu_custom_call.1} parent=51 // pred_check
          %p416 = pneg %p158
        $region66: #{tpu_custom_call.1} parent=51 // pred_check_branch
          %418 = sbr.rel (%p416) target = $region68
        $region67: #{tpu_custom_call.1} parent=51 // pred_region
          %419 = dma.done [#allocation9], 256
        $region68: #{tpu_custom_call.1} parent=51 // pred_fallthru
          _
        // Predicated region
        $region69: #{tpu_custom_call.1} parent=51 // pred_check
          %p420 = pneg %p200
        $region70: #{tpu_custom_call.1} parent=51 // pred_check_branch
          %422 = sbr.rel (%p420) target = $region72
        $region71: #{tpu_custom_call.1} parent=51 // pred_region
          %423 = dma.done [#allocation9], 512
        $region72: #{tpu_custom_call.1} parent=51 // pred_fallthru
          _
        %s424 = sand.u32 %s56, 1
        %s425 = scalar_lea.sflag [#allocation3], %s424
        %s426 = sand.u32 %s56, 1
        %s427 = smul.addr %s426, 16
        %s428 = scalar_lea.vmem [#allocation2], %s427
        %p429 = pneg %p69
        %p430 = pneg %p66
        %s431 = sand.u32 %s34, 1
        %s432 = scalar_lea.sflag [#allocation6], %s431
        %s433 = sand.u32 %s82, 1
        %s434 = smul.addr %s433, 16
        %s435 = scalar_lea.vmem [#allocation5], %s434
        %p436 = pneg %p95
        %p437 = pneg %p92
        %p438 = pneg %p116
        %p439 = pneg %p113
        %p440 = pneg %p137
        %p441 = pneg %p134
        %p442 = pneg %p158
        %p443 = pneg %p155
        %p444 = pneg %p179
        %p445 = pneg %p176
        %p446 = pneg %p200
        %p447 = pneg %p197
        %p448 = pneg %p221
        %p449 = pneg %p218
        %p450 = pneg %p249
        %p451 = pneg %p246
        %s452 = sand.u32 %s236, 1
        %s453 = scalar_lea.sflag [#allocation4], %s452
        %s454 = sand.u32 %s236, 1
        %s455 = smul.addr %s454, 16
        %s456 = scalar_lea.vmem [#allocation11], %s455
        %p457 = pneg %p277
        %p458 = pneg %p274
        %s459 = sand.u32 %s264, 1
        %s460 = scalar_lea.sflag [#allocation13], %s459
        %s461 = sand.u32 %s264, 1
        %s462 = smul.addr %s461, 64
        %s463 = scalar_lea.vmem [#allocation12], %s462
        %s464 = smul.u32 2, %s38
        %s465 = smul.u32 2, %s38
        %s466 = smul.u32 2, %s38
        %s467 = smul.u32 2, %s38
        %v468 = vld [vmem:[%s398] sm:$0xff]
        %v469 = vld [vmem:[%s398 + $0x8] sm:$0xff]
        %v470 = vld [vmem:[%s407] sm:$0xff]
        %v471 = vld [vmem:[%s407 + $0x8] sm:$0xff]
        %v472 = vld [vmem:[#allocation7] sm:$0xff]
        %v473 = vld [vmem:[#allocation7 + $0x8] sm:$0xff]
        %v474 = vld [vmem:[#allocation7 + $0x10] sm:$0xff]
        %v475 = vld [vmem:[#allocation7 + $0x18] sm:$0xff]
        %v476 = vld [vmem:[%s3] sm:$0x1]
        %v478 = vlaneseq
        %v479 = vshrl.u32 %v478, 7
        %v480 = vsub.s32 0, %v479
        %v481 = vrot.slane %v476, %v480
        %vm483 = vcmask 261120
        %v485 = vsel %vm483, %v468, 0
        %v488 = vsel %vm483, %v469, 0
        %490 = vmatprep.subr.mxu0 0.0
        %491 = vmatpush1.msra.mxu0 %v472
        %492 = vmatprep.subr.mxu0 0.0
        %493 = vmatpush1.msra.mxu0 %v473
        %494 = vmatprep.subr.mxu0 0.0
        %495 = vmatpush1.msra.mxu0 %v474
        %496 = vmatprep.subr.mxu0 0.0
        %497 = vmatpush1.msra.mxu0 %v475
        %498 = vmatprep.subr.mxu0 0.0
        %499 = vmatpush1.msra.mxu0 0.0
        %500 = vmatprep.subr.mxu0 0.0
        %501 = vmatpush1.msra.mxu0 0.0
        %502 = vmatprep.subr.mxu0 0.0
        %503 = vmatpush1.msra.mxu0 0.0
        %504 = vmatprep.subr.mxu0 0.0
        %505 = vmatpush1.msra.mxu0 0.0
        %506 = vmatprep.subr.mxu0 0.0
        %507 = vmatpush1.msra.mxu0 0.0
        %508 = vmatprep.subr.mxu0 0.0
        %509 = vmatpush1.msra.mxu0 0.0
        %510 = vmatprep.subr.mxu0 0.0
        %511 = vmatpush1.msra.mxu0 0.0
        %512 = vmatprep.subr.mxu0 0.0
        %513 = vmatpush1.msra.mxu0 0.0
        %514 = vmatprep.subr.mxu0 0.0
        %515 = vmatpush1.msra.mxu0 0.0
        %516 = vmatprep.subr.mxu0 0.0
        %517 = vmatpush1.msra.mxu0 0.0
        %518 = vmatprep.subr.mxu0 0.0
        %519 = vmatpush1.msra.mxu0 0.0
        %520 = vmatprep.subr.mxu0 0.0
        %521 = vmatpush1.msra.mxu0 0.0
        %522 = vmatprep.subr.mxu0 0.0
        %523 = vmatpush1.msra.mxu0 0.0
        %524 = vmatprep.subr.mxu0 0.0
        %525 = vmatpush1.msra.mxu0 0.0
        %526 = vmatprep.subr.mxu0 0.0
        %527 = vmatpush1.msra.mxu0 0.0
        %528 = vmatprep.subr.mxu0 0.0
        %529 = vmatpush1.msra.mxu0 0.0
        %530 = vmatprep.subr.mxu0 0.0
        %531 = vmatpush1.msra.mxu0 0.0
        %532 = vmatprep.subr.mxu0 0.0
        %533 = vmatpush1.msra.mxu0 0.0
        %534 = vmatprep.subr.mxu0 0.0
        %535 = vmatpush1.msra.mxu0 0.0
        %536 = vmatprep.subr.mxu0 0.0
        %537 = vmatpush1.msra.mxu0 0.0
        %538 = vmatprep.subr.mxu0 0.0
        %539 = vmatpush1.msra.mxu0 0.0
        %540 = vmatprep.subr.mxu0 0.0
        %541 = vmatpush1.msra.mxu0 0.0
        %542 = vmatprep.subr.mxu0 0.0
        %543 = vmatpush1.msra.mxu0 0.0
        %544 = vmatprep.subr.mxu0 0.0
        %545 = vmatpush1.msra.mxu0 0.0
        %546 = vmatprep.subr.mxu0 0.0
        %547 = vmatpush1.msra.mxu0 0.0
        %548 = vmatprep.subr.mxu0 0.0
        %549 = vmatpush1.msra.mxu0 0.0
        %550 = vmatprep.subr.mxu0 0.0
        %551 = vmatpush1.msra.mxu0 0.0
        %552 = vmatprep.subr.mxu0 0.0
        %553 = vmatpush1.msra.mxu0 0.0
        %554 = vmatprep.mubr.f32.mxu0 0.0
        %555 = vmatmul.mubr.f32.gmra.mrb[0].mxu0 %v485
        %v556 = vpop.f32.mrb[0].mxu0
        %v557 = vadd.f32 %v481, %v556
        %v558 = vpop.f32.mrb[0].mxu0
        %559 = vmatprep.mubr.f32.mxu0 0.0
        %560 = vmatmul.mubr.f32.gmra.mrb[0].mxu0 %v488
        %v561 = vpop.f32.mrb[0].mxu0
        %v562 = vadd.f32 %v481, %v561
        %v563 = vpop.f32.mrb[0].mxu0
        %564 = vdwg.mxu0
        %v565 = vld [vmem:[#allocation8] sm:$0xff]
        %v566 = vld [vmem:[#allocation8 + $0x8] sm:$0xff]
        %v567 = vld [vmem:[%s5] sm:$0x1]
        %v569 = vlaneseq
        %v570 = vshrl.u32 %v569, 7
        %v571 = vsub.s32 0, %v570
        %v572 = vrot.slane %v567, %v571
        %vm574 = vcmask 130048
        %v576 = vsel %vm574, %v470, 0
        %v579 = vsel %vm574, %v471, 0
        %581 = vmatprep.subr.mxu0 0.0
        %582 = vmatpush1.msra.mxu0 %v565
        %583 = vmatprep.subr.mxu0 0.0
        %584 = vmatpush1.msra.mxu0 %v566
        %585 = vmatprep.subr.mxu0 0.0
        %586 = vmatpush1.msra.mxu0 0.0
        %587 = vmatprep.subr.mxu0 0.0
        %588 = vmatpush1.msra.mxu0 0.0
        %589 = vmatprep.subr.mxu0 0.0
        %590 = vmatpush1.msra.mxu0 0.0
        %591 = vmatprep.subr.mxu0 0.0
        %592 = vmatpush1.msra.mxu0 0.0
        %593 = vmatprep.subr.mxu0 0.0
        %594 = vmatpush1.msra.mxu0 0.0
        %595 = vmatprep.subr.mxu0 0.0
        %596 = vmatpush1.msra.mxu0 0.0
        %597 = vmatprep.subr.mxu0 0.0
        %598 = vmatpush1.msra.mxu0 0.0
        %599 = vmatprep.subr.mxu0 0.0
        %600 = vmatpush1.msra.mxu0 0.0
        %601 = vmatprep.subr.mxu0 0.0
        %602 = vmatpush1.msra.mxu0 0.0
        %603 = vmatprep.subr.mxu0 0.0
        %604 = vmatpush1.msra.mxu0 0.0
        %605 = vmatprep.subr.mxu0 0.0
        %606 = vmatpush1.msra.mxu0 0.0
        %607 = vmatprep.subr.mxu0 0.0
        %608 = vmatpush1.msra.mxu0 0.0
        %609 = vmatprep.subr.mxu0 0.0
        %610 = vmatpush1.msra.mxu0 0.0
        %611 = vmatprep.subr.mxu0 0.0
        %612 = vmatpush1.msra.mxu0 0.0
        %613 = vmatprep.subr.mxu0 0.0
        %614 = vmatpush1.msra.mxu0 0.0
        %615 = vmatprep.subr.mxu0 0.0
        %616 = vmatpush1.msra.mxu0 0.0
        %617 = vmatprep.subr.mxu0 0.0
        %618 = vmatpush1.msra.mxu0 0.0
        %619 = vmatprep.subr.mxu0 0.0
        %620 = vmatpush1.msra.mxu0 0.0
        %621 = vmatprep.subr.mxu0 0.0
        %622 = vmatpush1.msra.mxu0 0.0
        %623 = vmatprep.subr.mxu0 0.0
        %624 = vmatpush1.msra.mxu0 0.0
        %625 = vmatprep.subr.mxu0 0.0
        %626 = vmatpush1.msra.mxu0 0.0
        %627 = vmatprep.subr.mxu0 0.0
        %628 = vmatpush1.msra.mxu0 0.0
        %629 = vmatprep.subr.mxu0 0.0
        %630 = vmatpush1.msra.mxu0 0.0
        %631 = vmatprep.subr.mxu0 0.0
        %632 = vmatpush1.msra.mxu0 0.0
        %633 = vmatprep.subr.mxu0 0.0
        %634 = vmatpush1.msra.mxu0 0.0
        %635 = vmatprep.subr.mxu0 0.0
        %636 = vmatpush1.msra.mxu0 0.0
        %637 = vmatprep.subr.mxu0 0.0
        %638 = vmatpush1.msra.mxu0 0.0
        %639 = vmatprep.subr.mxu0 0.0
        %640 = vmatpush1.msra.mxu0 0.0
        %641 = vmatprep.subr.mxu0 0.0
        %642 = vmatpush1.msra.mxu0 0.0
        %643 = vmatprep.subr.mxu0 0.0
        %644 = vmatpush1.msra.mxu0 0.0
        %645 = vmatprep.mubr.f32.mxu0 0.0
        %646 = vmatmul.mubr.f32.gmra.mrb[0].mxu0 %v576
        %v647 = vpop.f32.mrb[0].mxu0
        %v648 = vadd.f32 %v572, %v647
        %v649 = vpop.f32.mrb[0].mxu0
        %650 = vmatprep.mubr.f32.mxu0 0.0
        %651 = vmatmul.mubr.f32.gmra.mrb[0].mxu0 %v579
        %v652 = vpop.f32.mrb[0].mxu0
        %v653 = vadd.f32 %v572, %v652
        %v654 = vpop.f32.mrb[0].mxu0
        %655 = vdwg.mxu0
        %658 = vrot.lane.b32.xlu0 %v557, 120
        %v659 = vpop.permute.xlu0 %658
        %660 = vrot.lane.b32.xlu0 %v562, 120
        %v661 = vpop.permute.xlu0 %660
        %662 = vrot.lane.b32.xlu0 %v557, 112
        %v663 = vpop.permute.xlu0 %662
        %664 = vrot.lane.b32.xlu0 %v562, 112
        %v665 = vpop.permute.xlu0 %664
        %666 = vrot.lane.b32.xlu0 %v557, 104
        %v667 = vpop.permute.xlu0 %666
        %668 = vrot.lane.b32.xlu0 %v562, 104
        %v669 = vpop.permute.xlu0 %668
        %672 = vrot.lane.b32.xlu0 %v648, 120
        %v673 = vpop.permute.xlu0 %672
        %674 = vrot.lane.b32.xlu0 %v653, 120
        %v675 = vpop.permute.xlu0 %674
        %676 = vrot.lane.b32.xlu0 %v648, 112
        %v677 = vpop.permute.xlu0 %676
        %678 = vrot.lane.b32.xlu0 %v653, 112
        %v679 = vpop.permute.xlu0 %678
        %680 = vrot.lane.b32.xlu0 %v648, 104
        %v681 = vpop.permute.xlu0 %680
        %682 = vrot.lane.b32.xlu0 %v653, 104
        %v683 = vpop.permute.xlu0 %682
        %vm684 = vcmask 64512
        %v685 = vsel %vm684, %v557, 0
        %v687 = vsel %vm684, %v648, 0
        %689 = vmatprep.subr.mxu0 0.0
        %690 = vmatpush1.xpose.msra.mxu0 %v687
        %691 = vmatprep.subr.mxu0 0.0
        %692 = vmatpush1.xpose.msra.mxu0 0.0
        %693 = vmatprep.subr.mxu0 0.0
        %694 = vmatpush1.xpose.msra.mxu0 0.0
        %695 = vmatprep.subr.mxu0 0.0
        %696 = vmatpush1.xpose.msra.mxu0 0.0
        %697 = vmatprep.subr.mxu0 0.0
        %698 = vmatpush1.xpose.msra.mxu0 0.0
        %699 = vmatprep.subr.mxu0 0.0
        %700 = vmatpush1.xpose.msra.mxu0 0.0
        %701 = vmatprep.subr.mxu0 0.0
        %702 = vmatpush1.xpose.msra.mxu0 0.0
        %703 = vmatprep.subr.mxu0 0.0
        %704 = vmatpush1.xpose.msra.mxu0 0.0
        %705 = vmatprep.subr.mxu0 0.0
        %706 = vmatpush1.xpose.msra.mxu0 0.0
        %707 = vmatprep.subr.mxu0 0.0
        %708 = vmatpush1.xpose.msra.mxu0 0.0
        %709 = vmatprep.subr.mxu0 0.0
        %710 = vmatpush1.xpose.msra.mxu0 0.0
        %711 = vmatprep.subr.mxu0 0.0
        %712 = vmatpush1.xpose.msra.mxu0 0.0
        %713 = vmatprep.subr.mxu0 0.0
        %714 = vmatpush1.xpose.msra.mxu0 0.0
        %715 = vmatprep.subr.mxu0 0.0
        %716 = vmatpush1.xpose.msra.mxu0 0.0
        %717 = vmatprep.subr.mxu0 0.0
        %718 = vmatpush1.xpose.msra.mxu0 0.0
        %719 = vmatprep.subr.mxu0 0.0
        %720 = vmatpush1.xpose.msra.mxu0 0.0
        %721 = vmatprep.subr.mxu0 0.0
        %722 = vmatpush1.xpose.msra.mxu0 0.0
        %723 = vmatprep.subr.mxu0 0.0
        %724 = vmatpush1.xpose.msra.mxu0 0.0
        %725 = vmatprep.subr.mxu0 0.0
        %726 = vmatpush1.xpose.msra.mxu0 0.0
        %727 = vmatprep.subr.mxu0 0.0
        %728 = vmatpush1.xpose.msra.mxu0 0.0
        %729 = vmatprep.subr.mxu0 0.0
        %730 = vmatpush1.xpose.msra.mxu0 0.0
        %731 = vmatprep.subr.mxu0 0.0
        %732 = vmatpush1.xpose.msra.mxu0 0.0
        %733 = vmatprep.subr.mxu0 0.0
        %734 = vmatpush1.xpose.msra.mxu0 0.0
        %735 = vmatprep.subr.mxu0 0.0
        %736 = vmatpush1.xpose.msra.mxu0 0.0
        %737 = vmatprep.subr.mxu0 0.0
        %738 = vmatpush1.xpose.msra.mxu0 0.0
        %739 = vmatprep.subr.mxu0 0.0
        %740 = vmatpush1.xpose.msra.mxu0 0.0
        %741 = vmatprep.subr.mxu0 0.0
        %742 = vmatpush1.xpose.msra.mxu0 0.0
        %743 = vmatprep.subr.mxu0 0.0
        %744 = vmatpush1.xpose.msra.mxu0 0.0
        %745 = vmatprep.subr.mxu0 0.0
        %746 = vmatpush1.xpose.msra.mxu0 0.0
        %747 = vmatprep.subr.mxu0 0.0
        %748 = vmatpush1.xpose.msra.mxu0 0.0
        %749 = vmatprep.subr.mxu0 0.0
        %750 = vmatpush1.xpose.msra.mxu0 0.0
        %751 = vmatprep.subr.mxu0 0.0
        %752 = vmatpush1.xpose.msra.mxu0 0.0
        %753 = vmatprep.mubr.f32.mxu0 0.0
        %754 = vmatmul.mubr.f32.gmra.mrb[0].mxu0 %v685
        %v755 = vpop.f32.mrb[0].mxu0
        %v756 = vadd.f32 0.0, %v755
        %v757 = vpop.f32.mrb[0].mxu0
        %758 = vdwg.mxu0
        %v759 = vsel %vm684, %v562, 0
        %v761 = vsel %vm684, %v653, 0
        %763 = vmatprep.subr.mxu0 0.0
        %764 = vmatpush1.xpose.msra.mxu0 %v761
        %765 = vmatprep.subr.mxu0 0.0
        %766 = vmatpush1.xpose.msra.mxu0 0.0
        %767 = vmatprep.subr.mxu0 0.0
        %768 = vmatpush1.xpose.msra.mxu0 0.0
        %769 = vmatprep.subr.mxu0 0.0
        %770 = vmatpush1.xpose.msra.mxu0 0.0
        %771 = vmatprep.subr.mxu0 0.0
        %772 = vmatpush1.xpose.msra.mxu0 0.0
        %773 = vmatprep.subr.mxu0 0.0
        %774 = vmatpush1.xpose.msra.mxu0 0.0
        %775 = vmatprep.subr.mxu0 0.0
        %776 = vmatpush1.xpose.msra.mxu0 0.0
        %777 = vmatprep.subr.mxu0 0.0
        %778 = vmatpush1.xpose.msra.mxu0 0.0
        %779 = vmatprep.subr.mxu0 0.0
        %780 = vmatpush1.xpose.msra.mxu0 0.0
        %781 = vmatprep.subr.mxu0 0.0
        %782 = vmatpush1.xpose.msra.mxu0 0.0
        %783 = vmatprep.subr.mxu0 0.0
        %784 = vmatpush1.xpose.msra.mxu0 0.0
        %785 = vmatprep.subr.mxu0 0.0
        %786 = vmatpush1.xpose.msra.mxu0 0.0
        %787 = vmatprep.subr.mxu0 0.0
        %788 = vmatpush1.xpose.msra.mxu0 0.0
        %789 = vmatprep.subr.mxu0 0.0
        %790 = vmatpush1.xpose.msra.mxu0 0.0
        %791 = vmatprep.subr.mxu0 0.0
        %792 = vmatpush1.xpose.msra.mxu0 0.0
        %793 = vmatprep.subr.mxu0 0.0
        %794 = vmatpush1.xpose.msra.mxu0 0.0
        %795 = vmatprep.subr.mxu0 0.0
        %796 = vmatpush1.xpose.msra.mxu0 0.0
        %797 = vmatprep.subr.mxu0 0.0
        %798 = vmatpush1.xpose.msra.mxu0 0.0
        %799 = vmatprep.subr.mxu0 0.0
        %800 = vmatpush1.xpose.msra.mxu0 0.0
        %801 = vmatprep.subr.mxu0 0.0
        %802 = vmatpush1.xpose.msra.mxu0 0.0
        %803 = vmatprep.subr.mxu0 0.0
        %804 = vmatpush1.xpose.msra.mxu0 0.0
        %805 = vmatprep.subr.mxu0 0.0
        %806 = vmatpush1.xpose.msra.mxu0 0.0
        %807 = vmatprep.subr.mxu0 0.0
        %808 = vmatpush1.xpose.msra.mxu0 0.0
        %809 = vmatprep.subr.mxu0 0.0
        %810 = vmatpush1.xpose.msra.mxu0 0.0
        %811 = vmatprep.subr.mxu0 0.0
        %812 = vmatpush1.xpose.msra.mxu0 0.0
        %813 = vmatprep.subr.mxu0 0.0
        %814 = vmatpush1.xpose.msra.mxu0 0.0
        %815 = vmatprep.subr.mxu0 0.0
        %816 = vmatpush1.xpose.msra.mxu0 0.0
        %817 = vmatprep.subr.mxu0 0.0
        %818 = vmatpush1.xpose.msra.mxu0 0.0
        %819 = vmatprep.subr.mxu0 0.0
        %820 = vmatpush1.xpose.msra.mxu0 0.0
        %821 = vmatprep.subr.mxu0 0.0
        %822 = vmatpush1.xpose.msra.mxu0 0.0
        %823 = vmatprep.subr.mxu0 0.0
        %824 = vmatpush1.xpose.msra.mxu0 0.0
        %825 = vmatprep.subr.mxu0 0.0
        %826 = vmatpush1.xpose.msra.mxu0 0.0
        %827 = vmatprep.mubr.f32.mxu0 0.0
        %828 = vmatmul.mubr.f32.gmra.mrb[0].mxu0 %v759
        %v829 = vpop.f32.mrb[0].mxu0
        %v830 = vadd.f32 0.0, %v829
        %v831 = vpop.f32.mrb[0].mxu0
        %832 = vdwg.mxu0
        %v833 = vsel %vm684, %v659, 0
        %v835 = vsel %vm684, %v673, 0
        %837 = vmatprep.subr.mxu0 0.0
        %838 = vmatpush1.xpose.msra.mxu0 %v835
        %839 = vmatprep.subr.mxu0 0.0
        %840 = vmatpush1.xpose.msra.mxu0 0.0
        %841 = vmatprep.subr.mxu0 0.0
        %842 = vmatpush1.xpose.msra.mxu0 0.0
        %843 = vmatprep.subr.mxu0 0.0
        %844 = vmatpush1.xpose.msra.mxu0 0.0
        %845 = vmatprep.subr.mxu0 0.0
        %846 = vmatpush1.xpose.msra.mxu0 0.0
        %847 = vmatprep.subr.mxu0 0.0
        %848 = vmatpush1.xpose.msra.mxu0 0.0
        %849 = vmatprep.subr.mxu0 0.0
        %850 = vmatpush1.xpose.msra.mxu0 0.0
        %851 = vmatprep.subr.mxu0 0.0
        %852 = vmatpush1.xpose.msra.mxu0 0.0
        %853 = vmatprep.subr.mxu0 0.0
        %854 = vmatpush1.xpose.msra.mxu0 0.0
        %855 = vmatprep.subr.mxu0 0.0
        %856 = vmatpush1.xpose.msra.mxu0 0.0
        %857 = vmatprep.subr.mxu0 0.0
        %858 = vmatpush1.xpose.msra.mxu0 0.0
        %859 = vmatprep.subr.mxu0 0.0
        %860 = vmatpush1.xpose.msra.mxu0 0.0
        %861 = vmatprep.subr.mxu0 0.0
        %862 = vmatpush1.xpose.msra.mxu0 0.0
        %863 = vmatprep.subr.mxu0 0.0
        %864 = vmatpush1.xpose.msra.mxu0 0.0
        %865 = vmatprep.subr.mxu0 0.0
        %866 = vmatpush1.xpose.msra.mxu0 0.0
        %867 = vmatprep.subr.mxu0 0.0
        %868 = vmatpush1.xpose.msra.mxu0 0.0
        %869 = vmatprep.subr.mxu0 0.0
        %870 = vmatpush1.xpose.msra.mxu0 0.0
        %871 = vmatprep.subr.mxu0 0.0
        %872 = vmatpush1.xpose.msra.mxu0 0.0
        %873 = vmatprep.subr.mxu0 0.0
        %874 = vmatpush1.xpose.msra.mxu0 0.0
        %875 = vmatprep.subr.mxu0 0.0
        %876 = vmatpush1.xpose.msra.mxu0 0.0
        %877 = vmatprep.subr.mxu0 0.0
        %878 = vmatpush1.xpose.msra.mxu0 0.0
        %879 = vmatprep.subr.mxu0 0.0
        %880 = vmatpush1.xpose.msra.mxu0 0.0
        %881 = vmatprep.subr.mxu0 0.0
        %882 = vmatpush1.xpose.msra.mxu0 0.0
        %883 = vmatprep.subr.mxu0 0.0
        %884 = vmatpush1.xpose.msra.mxu0 0.0
        %885 = vmatprep.subr.mxu0 0.0
        %886 = vmatpush1.xpose.msra.mxu0 0.0
        %887 = vmatprep.subr.mxu0 0.0
        %888 = vmatpush1.xpose.msra.mxu0 0.0
        %889 = vmatprep.subr.mxu0 0.0
        %890 = vmatpush1.xpose.msra.mxu0 0.0
        %891 = vmatprep.subr.mxu0 0.0
        %892 = vmatpush1.xpose.msra.mxu0 0.0
        %893 = vmatprep.subr.mxu0 0.0
        %894 = vmatpush1.xpose.msra.mxu0 0.0
        %895 = vmatprep.subr.mxu0 0.0
        %896 = vmatpush1.xpose.msra.mxu0 0.0
        %897 = vmatprep.subr.mxu0 0.0
        %898 = vmatpush1.xpose.msra.mxu0 0.0
        %899 = vmatprep.subr.mxu0 0.0
        %900 = vmatpush1.xpose.msra.mxu0 0.0
        %901 = vmatprep.mubr.f32.mxu0 0.0
        %902 = vmatmul.mubr.f32.gmra.mrb[0].mxu0 %v833
        %v903 = vpop.f32.mrb[0].mxu0
        %v904 = vadd.f32 0.0, %v903
        %v905 = vpop.f32.mrb[0].mxu0
        %906 = vdwg.mxu0
        %v907 = vsel %vm684, %v661, 0
        %v909 = vsel %vm684, %v675, 0
        %911 = vmatprep.subr.mxu0 0.0
        %912 = vmatpush1.xpose.msra.mxu0 %v909
        %913 = vmatprep.subr.mxu0 0.0
        %914 = vmatpush1.xpose.msra.mxu0 0.0
        %915 = vmatprep.subr.mxu0 0.0
        %916 = vmatpush1.xpose.msra.mxu0 0.0
        %917 = vmatprep.subr.mxu0 0.0
        %918 = vmatpush1.xpose.msra.mxu0 0.0
        %919 = vmatprep.subr.mxu0 0.0
        %920 = vmatpush1.xpose.msra.mxu0 0.0
        %921 = vmatprep.subr.mxu0 0.0
        %922 = vmatpush1.xpose.msra.mxu0 0.0
        %923 = vmatprep.subr.mxu0 0.0
        %924 = vmatpush1.xpose.msra.mxu0 0.0
        %925 = vmatprep.subr.mxu0 0.0
        %926 = vmatpush1.xpose.msra.mxu0 0.0
        %927 = vmatprep.subr.mxu0 0.0
        %928 = vmatpush1.xpose.msra.mxu0 0.0
        %929 = vmatprep.subr.mxu0 0.0
        %930 = vmatpush1.xpose.msra.mxu0 0.0
        %931 = vmatprep.subr.mxu0 0.0
        %932 = vmatpush1.xpose.msra.mxu0 0.0
        %933 = vmatprep.subr.mxu0 0.0
        %934 = vmatpush1.xpose.msra.mxu0 0.0
        %935 = vmatprep.subr.mxu0 0.0
        %936 = vmatpush1.xpose.msra.mxu0 0.0
        %937 = vmatprep.subr.mxu0 0.0
        %938 = vmatpush1.xpose.msra.mxu0 0.0
        %939 = vmatprep.subr.mxu0 0.0
        %940 = vmatpush1.xpose.msra.mxu0 0.0
        %941 = vmatprep.subr.mxu0 0.0
        %942 = vmatpush1.xpose.msra.mxu0 0.0
        %943 = vmatprep.subr.mxu0 0.0
        %944 = vmatpush1.xpose.msra.mxu0 0.0
        %945 = vmatprep.subr.mxu0 0.0
        %946 = vmatpush1.xpose.msra.mxu0 0.0
        %947 = vmatprep.subr.mxu0 0.0
        %948 = vmatpush1.xpose.msra.mxu0 0.0
        %949 = vmatprep.subr.mxu0 0.0
        %950 = vmatpush1.xpose.msra.mxu0 0.0
        %951 = vmatprep.subr.mxu0 0.0
        %952 = vmatpush1.xpose.msra.mxu0 0.0
        %953 = vmatprep.subr.mxu0 0.0
        %954 = vmatpush1.xpose.msra.mxu0 0.0
        %955 = vmatprep.subr.mxu0 0.0
        %956 = vmatpush1.xpose.msra.mxu0 0.0
        %957 = vmatprep.subr.mxu0 0.0
        %958 = vmatpush1.xpose.msra.mxu0 0.0
        %959 = vmatprep.subr.mxu0 0.0
        %960 = vmatpush1.xpose.msra.mxu0 0.0
        %961 = vmatprep.subr.mxu0 0.0
        %962 = vmatpush1.xpose.msra.mxu0 0.0
        %963 = vmatprep.subr.mxu0 0.0
        %964 = vmatpush1.xpose.msra.mxu0 0.0
        %965 = vmatprep.subr.mxu0 0.0
        %966 = vmatpush1.xpose.msra.mxu0 0.0
        %967 = vmatprep.subr.mxu0 0.0
        %968 = vmatpush1.xpose.msra.mxu0 0.0
        %969 = vmatprep.subr.mxu0 0.0
        %970 = vmatpush1.xpose.msra.mxu0 0.0
        %971 = vmatprep.subr.mxu0 0.0
        %972 = vmatpush1.xpose.msra.mxu0 0.0
        %973 = vmatprep.subr.mxu0 0.0
        %974 = vmatpush1.xpose.msra.mxu0 0.0
        %975 = vmatprep.mubr.f32.mxu0 0.0
        %976 = vmatmul.mubr.f32.gmra.mrb[0].mxu0 %v907
        %v977 = vpop.f32.mrb[0].mxu0
        %v978 = vadd.f32 0.0, %v977
        %v979 = vpop.f32.mrb[0].mxu0
        %980 = vdwg.mxu0
        %v981 = vsel %vm684, %v663, 0
        %v983 = vsel %vm684, %v677, 0
        %985 = vmatprep.subr.mxu0 0.0
        %986 = vmatpush1.xpose.msra.mxu0 %v983
        %987 = vmatprep.subr.mxu0 0.0
        %988 = vmatpush1.xpose.msra.mxu0 0.0
        %989 = vmatprep.subr.mxu0 0.0
        %990 = vmatpush1.xpose.msra.mxu0 0.0
        %991 = vmatprep.subr.mxu0 0.0
        %992 = vmatpush1.xpose.msra.mxu0 0.0
        %993 = vmatprep.subr.mxu0 0.0
        %994 = vmatpush1.xpose.msra.mxu0 0.0
        %995 = vmatprep.subr.mxu0 0.0
        %996 = vmatpush1.xpose.msra.mxu0 0.0
        %997 = vmatprep.subr.mxu0 0.0
        %998 = vmatpush1.xpose.msra.mxu0 0.0
        %999 = vmatprep.subr.mxu0 0.0
        %1000 = vmatpush1.xpose.msra.mxu0 0.0
        %1001 = vmatprep.subr.mxu0 0.0
        %1002 = vmatpush1.xpose.msra.mxu0 0.0
        %1003 = vmatprep.subr.mxu0 0.0
        %1004 = vmatpush1.xpose.msra.mxu0 0.0
        %1005 = vmatprep.subr.mxu0 0.0
        %1006 = vmatpush1.xpose.msra.mxu0 0.0
        %1007 = vmatprep.subr.mxu0 0.0
        %1008 = vmatpush1.xpose.msra.mxu0 0.0
        %1009 = vmatprep.subr.mxu0 0.0
        %1010 = vmatpush1.xpose.msra.mxu0 0.0
        %1011 = vmatprep.subr.mxu0 0.0
        %1012 = vmatpush1.xpose.msra.mxu0 0.0
        %1013 = vmatprep.subr.mxu0 0.0
        %1014 = vmatpush1.xpose.msra.mxu0 0.0
        %1015 = vmatprep.subr.mxu0 0.0
        %1016 = vmatpush1.xpose.msra.mxu0 0.0
        %1017 = vmatprep.subr.mxu0 0.0
        %1018 = vmatpush1.xpose.msra.mxu0 0.0
        %1019 = vmatprep.subr.mxu0 0.0
        %1020 = vmatpush1.xpose.msra.mxu0 0.0
        %1021 = vmatprep.subr.mxu0 0.0
        %1022 = vmatpush1.xpose.msra.mxu0 0.0
        %1023 = vmatprep.subr.mxu0 0.0
        %1024 = vmatpush1.xpose.msra.mxu0 0.0
        %1025 = vmatprep.subr.mxu0 0.0
        %1026 = vmatpush1.xpose.msra.mxu0 0.0
        %1027 = vmatprep.subr.mxu0 0.0
        %1028 = vmatpush1.xpose.msra.mxu0 0.0
        %1029 = vmatprep.subr.mxu0 0.0
        %1030 = vmatpush1.xpose.msra.mxu0 0.0
        %1031 = vmatprep.subr.mxu0 0.0
        %1032 = vmatpush1.xpose.msra.mxu0 0.0
        %1033 = vmatprep.subr.mxu0 0.0
        %1034 = vmatpush1.xpose.msra.mxu0 0.0
        %1035 = vmatprep.subr.mxu0 0.0
        %1036 = vmatpush1.xpose.msra.mxu0 0.0
        %1037 = vmatprep.subr.mxu0 0.0
        %1038 = vmatpush1.xpose.msra.mxu0 0.0
        %1039 = vmatprep.subr.mxu0 0.0
        %1040 = vmatpush1.xpose.msra.mxu0 0.0
        %1041 = vmatprep.subr.mxu0 0.0
        %1042 = vmatpush1.xpose.msra.mxu0 0.0
        %1043 = vmatprep.subr.mxu0 0.0
        %1044 = vmatpush1.xpose.msra.mxu0 0.0
        %1045 = vmatprep.subr.mxu0 0.0
        %1046 = vmatpush1.xpose.msra.mxu0 0.0
        %1047 = vmatprep.subr.mxu0 0.0
        %1048 = vmatpush1.xpose.msra.mxu0 0.0
        %1049 = vmatprep.mubr.f32.mxu0 0.0
        %1050 = vmatmul.mubr.f32.gmra.mrb[0].mxu0 %v981
        %v1051 = vpop.f32.mrb[0].mxu0
        %v1052 = vadd.f32 0.0, %v1051
        %v1053 = vpop.f32.mrb[0].mxu0
        %1054 = vdwg.mxu0
        %v1055 = vsel %vm684, %v665, 0
        %v1057 = vsel %vm684, %v679, 0
        %1059 = vmatprep.subr.mxu0 0.0
        %1060 = vmatpush1.xpose.msra.mxu0 %v1057
        %1061 = vmatprep.subr.mxu0 0.0
        %1062 = vmatpush1.xpose.msra.mxu0 0.0
        %1063 = vmatprep.subr.mxu0 0.0
        %1064 = vmatpush1.xpose.msra.mxu0 0.0
        %1065 = vmatprep.subr.mxu0 0.0
        %1066 = vmatpush1.xpose.msra.mxu0 0.0
        %1067 = vmatprep.subr.mxu0 0.0
        %1068 = vmatpush1.xpose.msra.mxu0 0.0
        %1069 = vmatprep.subr.mxu0 0.0
        %1070 = vmatpush1.xpose.msra.mxu0 0.0
        %1071 = vmatprep.subr.mxu0 0.0
        %1072 = vmatpush1.xpose.msra.mxu0 0.0
        %1073 = vmatprep.subr.mxu0 0.0
        %1074 = vmatpush1.xpose.msra.mxu0 0.0
        %1075 = vmatprep.subr.mxu0 0.0
        %1076 = vmatpush1.xpose.msra.mxu0 0.0
        %1077 = vmatprep.subr.mxu0 0.0
        %1078 = vmatpush1.xpose.msra.mxu0 0.0
        %1079 = vmatprep.subr.mxu0 0.0
        %1080 = vmatpush1.xpose.msra.mxu0 0.0
        %1081 = vmatprep.subr.mxu0 0.0
        %1082 = vmatpush1.xpose.msra.mxu0 0.0
        %1083 = vmatprep.subr.mxu0 0.0
        %1084 = vmatpush1.xpose.msra.mxu0 0.0
        %1085 = vmatprep.subr.mxu0 0.0
        %1086 = vmatpush1.xpose.msra.mxu0 0.0
        %1087 = vmatprep.subr.mxu0 0.0
        %1088 = vmatpush1.xpose.msra.mxu0 0.0
        %1089 = vmatprep.subr.mxu0 0.0
        %1090 = vmatpush1.xpose.msra.mxu0 0.0
        %1091 = vmatprep.subr.mxu0 0.0
        %1092 = vmatpush1.xpose.msra.mxu0 0.0
        %1093 = vmatprep.subr.mxu0 0.0
        %1094 = vmatpush1.xpose.msra.mxu0 0.0
        %1095 = vmatprep.subr.mxu0 0.0
        %1096 = vmatpush1.xpose.msra.mxu0 0.0
        %1097 = vmatprep.subr.mxu0 0.0
        %1098 = vmatpush1.xpose.msra.mxu0 0.0
        %1099 = vmatprep.subr.mxu0 0.0
        %1100 = vmatpush1.xpose.msra.mxu0 0.0
        %1101 = vmatprep.subr.mxu0 0.0
        %1102 = vmatpush1.xpose.msra.mxu0 0.0
        %1103 = vmatprep.subr.mxu0 0.0
        %1104 = vmatpush1.xpose.msra.mxu0 0.0
        %1105 = vmatprep.subr.mxu0 0.0
        %1106 = vmatpush1.xpose.msra.mxu0 0.0
        %1107 = vmatprep.subr.mxu0 0.0
        %1108 = vmatpush1.xpose.msra.mxu0 0.0
        %1109 = vmatprep.subr.mxu0 0.0
        %1110 = vmatpush1.xpose.msra.mxu0 0.0
        %1111 = vmatprep.subr.mxu0 0.0
        %1112 = vmatpush1.xpose.msra.mxu0 0.0
        %1113 = vmatprep.subr.mxu0 0.0
        %1114 = vmatpush1.xpose.msra.mxu0 0.0
        %1115 = vmatprep.subr.mxu0 0.0
        %1116 = vmatpush1.xpose.msra.mxu0 0.0
        %1117 = vmatprep.subr.mxu0 0.0
        %1118 = vmatpush1.xpose.msra.mxu0 0.0
        %1119 = vmatprep.subr.mxu0 0.0
        %1120 = vmatpush1.xpose.msra.mxu0 0.0
        %1121 = vmatprep.subr.mxu0 0.0
        %1122 = vmatpush1.xpose.msra.mxu0 0.0
        %1123 = vmatprep.mubr.f32.mxu0 0.0
        %1124 = vmatmul.mubr.f32.gmra.mrb[0].mxu0 %v1055
        %v1125 = vpop.f32.mrb[0].mxu0
        %v1126 = vadd.f32 0.0, %v1125
        %v1127 = vpop.f32.mrb[0].mxu0
        %1128 = vdwg.mxu0
        %v1129 = vsel %vm684, %v667, 0
        %v1131 = vsel %vm684, %v681, 0
        %1133 = vmatprep.subr.mxu0 0.0
        %1134 = vmatpush1.xpose.msra.mxu0 %v1131
        %1135 = vmatprep.subr.mxu0 0.0
        %1136 = vmatpush1.xpose.msra.mxu0 0.0
        %1137 = vmatprep.subr.mxu0 0.0
        %1138 = vmatpush1.xpose.msra.mxu0 0.0
        %1139 = vmatprep.subr.mxu0 0.0
        %1140 = vmatpush1.xpose.msra.mxu0 0.0
        %1141 = vmatprep.subr.mxu0 0.0
        %1142 = vmatpush1.xpose.msra.mxu0 0.0
        %1143 = vmatprep.subr.mxu0 0.0
        %1144 = vmatpush1.xpose.msra.mxu0 0.0
        %1145 = vmatprep.subr.mxu0 0.0
        %1146 = vmatpush1.xpose.msra.mxu0 0.0
        %1147 = vmatprep.subr.mxu0 0.0
        %1148 = vmatpush1.xpose.msra.mxu0 0.0
        %1149 = vmatprep.subr.mxu0 0.0
        %1150 = vmatpush1.xpose.msra.mxu0 0.0
        %1151 = vmatprep.subr.mxu0 0.0
        %1152 = vmatpush1.xpose.msra.mxu0 0.0
        %1153 = vmatprep.subr.mxu0 0.0
        %1154 = vmatpush1.xpose.msra.mxu0 0.0
        %1155 = vmatprep.subr.mxu0 0.0
        %1156 = vmatpush1.xpose.msra.mxu0 0.0
        %1157 = vmatprep.subr.mxu0 0.0
        %1158 = vmatpush1.xpose.msra.mxu0 0.0
        %1159 = vmatprep.subr.mxu0 0.0
        %1160 = vmatpush1.xpose.msra.mxu0 0.0
        %1161 = vmatprep.subr.mxu0 0.0
        %1162 = vmatpush1.xpose.msra.mxu0 0.0
        %1163 = vmatprep.subr.mxu0 0.0
        %1164 = vmatpush1.xpose.msra.mxu0 0.0
        %1165 = vmatprep.subr.mxu0 0.0
        %1166 = vmatpush1.xpose.msra.mxu0 0.0
        %1167 = vmatprep.subr.mxu0 0.0
        %1168 = vmatpush1.xpose.msra.mxu0 0.0
        %1169 = vmatprep.subr.mxu0 0.0
        %1170 = vmatpush1.xpose.msra.mxu0 0.0
        %1171 = vmatprep.subr.mxu0 0.0
        %1172 = vmatpush1.xpose.msra.mxu0 0.0
        %1173 = vmatprep.subr.mxu0 0.0
        %1174 = vmatpush1.xpose.msra.mxu0 0.0
        %1175 = vmatprep.subr.mxu0 0.0
        %1176 = vmatpush1.xpose.msra.mxu0 0.0
        %1177 = vmatprep.subr.mxu0 0.0
        %1178 = vmatpush1.xpose.msra.mxu0 0.0
        %1179 = vmatprep.subr.mxu0 0.0
        %1180 = vmatpush1.xpose.msra.mxu0 0.0
        %1181 = vmatprep.subr.mxu0 0.0
        %1182 = vmatpush1.xpose.msra.mxu0 0.0
        %1183 = vmatprep.subr.mxu0 0.0
        %1184 = vmatpush1.xpose.msra.mxu0 0.0
        %1185 = vmatprep.subr.mxu0 0.0
        %1186 = vmatpush1.xpose.msra.mxu0 0.0
        %1187 = vmatprep.subr.mxu0 0.0
        %1188 = vmatpush1.xpose.msra.mxu0 0.0
        %1189 = vmatprep.subr.mxu0 0.0
        %1190 = vmatpush1.xpose.msra.mxu0 0.0
        %1191 = vmatprep.subr.mxu0 0.0
        %1192 = vmatpush1.xpose.msra.mxu0 0.0
        %1193 = vmatprep.subr.mxu0 0.0
        %1194 = vmatpush1.xpose.msra.mxu0 0.0
        %1195 = vmatprep.subr.mxu0 0.0
        %1196 = vmatpush1.xpose.msra.mxu0 0.0
        %1197 = vmatprep.mubr.f32.mxu0 0.0
        %1198 = vmatmul.mubr.f32.gmra.mrb[0].mxu0 %v1129
        %v1199 = vpop.f32.mrb[0].mxu0
        %v1200 = vadd.f32 0.0, %v1199
        %v1201 = vpop.f32.mrb[0].mxu0
        %1202 = vdwg.mxu0
        %v1203 = vsel %vm684, %v669, 0
        %v1205 = vsel %vm684, %v683, 0
        %1207 = vmatprep.subr.mxu0 0.0
        %1208 = vmatpush1.xpose.msra.mxu0 %v1205
        %1209 = vmatprep.subr.mxu0 0.0
        %1210 = vmatpush1.xpose.msra.mxu0 0.0
        %1211 = vmatprep.subr.mxu0 0.0
        %1212 = vmatpush1.xpose.msra.mxu0 0.0
        %1213 = vmatprep.subr.mxu0 0.0
        %1214 = vmatpush1.xpose.msra.mxu0 0.0
        %1215 = vmatprep.subr.mxu0 0.0
        %1216 = vmatpush1.xpose.msra.mxu0 0.0
        %1217 = vmatprep.subr.mxu0 0.0
        %1218 = vmatpush1.xpose.msra.mxu0 0.0
        %1219 = vmatprep.subr.mxu0 0.0
        %1220 = vmatpush1.xpose.msra.mxu0 0.0
        %1221 = vmatprep.subr.mxu0 0.0
        %1222 = vmatpush1.xpose.msra.mxu0 0.0
        %1223 = vmatprep.subr.mxu0 0.0
        %1224 = vmatpush1.xpose.msra.mxu0 0.0
        %1225 = vmatprep.subr.mxu0 0.0
        %1226 = vmatpush1.xpose.msra.mxu0 0.0
        %1227 = vmatprep.subr.mxu0 0.0
        %1228 = vmatpush1.xpose.msra.mxu0 0.0
        %1229 = vmatprep.subr.mxu0 0.0
        %1230 = vmatpush1.xpose.msra.mxu0 0.0
        %1231 = vmatprep.subr.mxu0 0.0
        %1232 = vmatpush1.xpose.msra.mxu0 0.0
        %1233 = vmatprep.subr.mxu0 0.0
        %1234 = vmatpush1.xpose.msra.mxu0 0.0
        %1235 = vmatprep.subr.mxu0 0.0
        %1236 = vmatpush1.xpose.msra.mxu0 0.0
        %1237 = vmatprep.subr.mxu0 0.0
        %1238 = vmatpush1.xpose.msra.mxu0 0.0
        %1239 = vmatprep.subr.mxu0 0.0
        %1240 = vmatpush1.xpose.msra.mxu0 0.0
        %1241 = vmatprep.subr.mxu0 0.0
        %1242 = vmatpush1.xpose.msra.mxu0 0.0
        %1243 = vmatprep.subr.mxu0 0.0
        %1244 = vmatpush1.xpose.msra.mxu0 0.0
        %1245 = vmatprep.subr.mxu0 0.0
        %1246 = vmatpush1.xpose.msra.mxu0 0.0
        %1247 = vmatprep.subr.mxu0 0.0
        %1248 = vmatpush1.xpose.msra.mxu0 0.0
        %1249 = vmatprep.subr.mxu0 0.0
        %1250 = vmatpush1.xpose.msra.mxu0 0.0
        %1251 = vmatprep.subr.mxu0 0.0
        %1252 = vmatpush1.xpose.msra.mxu0 0.0
        %1253 = vmatprep.subr.mxu0 0.0
        %1254 = vmatpush1.xpose.msra.mxu0 0.0
        %1255 = vmatprep.subr.mxu0 0.0
        %1256 = vmatpush1.xpose.msra.mxu0 0.0
        %1257 = vmatprep.subr.mxu0 0.0
        %1258 = vmatpush1.xpose.msra.mxu0 0.0
        %1259 = vmatprep.subr.mxu0 0.0
        %1260 = vmatpush1.xpose.msra.mxu0 0.0
        %1261 = vmatprep.subr.mxu0 0.0
        %1262 = vmatpush1.xpose.msra.mxu0 0.0
        %1263 = vmatprep.subr.mxu0 0.0
        %1264 = vmatpush1.xpose.msra.mxu0 0.0
        %1265 = vmatprep.subr.mxu0 0.0
        %1266 = vmatpush1.xpose.msra.mxu0 0.0
        %1267 = vmatprep.subr.mxu0 0.0
        %1268 = vmatpush1.xpose.msra.mxu0 0.0
        %1269 = vmatprep.subr.mxu0 0.0
        %1270 = vmatpush1.xpose.msra.mxu0 0.0
        %1271 = vmatprep.mubr.f32.mxu0 0.0
        %1272 = vmatmul.mubr.f32.gmra.mrb[0].mxu0 %v1203
        %v1273 = vpop.f32.mrb[0].mxu0
        %v1274 = vadd.f32 0.0, %v1273
        %v1275 = vpop.f32.mrb[0].mxu0
        %1276 = vdwg.mxu0
        %v1277 = vsel %vm684, %v756, -inf
        %1278 = vmax.xlane.f32.xlu0 %v1277
        %v1279 = vpop.xlane.xlu0 %1278
        %v1280 = vsel %vm684, %v830, -inf
        %1281 = vmax.xlane.f32.xlu0 %v1280
        %v1282 = vpop.xlane.xlu0 %1281
        %v1283 = vsel %vm684, %v904, -inf
        %1284 = vmax.xlane.f32.xlu0 %v1283
        %v1285 = vpop.xlane.xlu0 %1284
        %v1286 = vsel %vm684, %v978, -inf
        %1287 = vmax.xlane.f32.xlu0 %v1286
        %v1288 = vpop.xlane.xlu0 %1287
        %v1289 = vsel %vm684, %v1052, -inf
        %1290 = vmax.xlane.f32.xlu0 %v1289
        %v1291 = vpop.xlane.xlu0 %1290
        %v1292 = vsel %vm684, %v1126, -inf
        %1293 = vmax.xlane.f32.xlu0 %v1292
        %v1294 = vpop.xlane.xlu0 %1293
        %v1295 = vsel %vm684, %v1200, -inf
        %1296 = vmax.xlane.f32.xlu0 %v1295
        %v1297 = vpop.xlane.xlu0 %1296
        %v1298 = vsel %vm684, %v1274, -inf
        %1299 = vmax.xlane.f32.xlu0 %v1298
        %v1300 = vpop.xlane.xlu0 %1299
        %v1301 = vsub.f32 %v756, %v1279
        %v1302 = vsub.f32 %v830, %v1282
        %v1303 = vsub.f32 %v904, %v1285
        %v1304 = vsub.f32 %v978, %v1288
        %v1305 = vsub.f32 %v1052, %v1291
        %v1306 = vsub.f32 %v1126, %v1294
        %v1307 = vsub.f32 %v1200, %v1297
        %v1308 = vsub.f32 %v1274, %v1300
        %v1309 = vmul.f32 %v1301, 1.442695
        %v1310 = vpow.pop %v1309
        %v1311 = vmul.f32 %v1302, 1.442695
        %v1312 = vpow.pop %v1311
        %v1313 = vmul.f32 %v1303, 1.442695
        %v1314 = vpow.pop %v1313
        %v1315 = vmul.f32 %v1304, 1.442695
        %v1316 = vpow.pop %v1315
        %v1317 = vmul.f32 %v1305, 1.442695
        %v1318 = vpow.pop %v1317
        %v1319 = vmul.f32 %v1306, 1.442695
        %v1320 = vpow.pop %v1319
        %v1321 = vmul.f32 %v1307, 1.442695
        %v1322 = vpow.pop %v1321
        %v1323 = vmul.f32 %v1308, 1.442695
        %v1324 = vpow.pop %v1323
        %v1325 = vsel %vm684, %v1310, 0.0
        %1326 = vadd.xlane.f32.xlu0 %v1325
        %v1327 = vpop.xlane.xlu0 %1326
        %v1328 = vsel %vm684, %v1312, 0.0
        %1329 = vadd.xlane.f32.xlu0 %v1328
        %v1330 = vpop.xlane.xlu0 %1329
        %v1331 = vsel %vm684, %v1314, 0.0
        %1332 = vadd.xlane.f32.xlu0 %v1331
        %v1333 = vpop.xlane.xlu0 %1332
        %v1334 = vsel %vm684, %v1316, 0.0
        %1335 = vadd.xlane.f32.xlu0 %v1334
        %v1336 = vpop.xlane.xlu0 %1335
        %v1337 = vsel %vm684, %v1318, 0.0
        %1338 = vadd.xlane.f32.xlu0 %v1337
        %v1339 = vpop.xlane.xlu0 %1338
        %v1340 = vsel %vm684, %v1320, 0.0
        %1341 = vadd.xlane.f32.xlu0 %v1340
        %v1342 = vpop.xlane.xlu0 %1341
        %v1343 = vsel %vm684, %v1322, 0.0
        %1344 = vadd.xlane.f32.xlu0 %v1343
        %v1345 = vpop.xlane.xlu0 %1344
        %v1346 = vsel %vm684, %v1324, 0.0
        %1347 = vadd.xlane.f32.xlu0 %v1346
        %v1348 = vpop.xlane.xlu0 %1347
        %v1349 = vrcp.pop %v1327
        %v1350 = vrcp.pop %v1330
        %v1351 = vrcp.pop %v1333
        %v1352 = vrcp.pop %v1336
        %v1353 = vrcp.pop %v1339
        %v1354 = vrcp.pop %v1342
        %v1355 = vrcp.pop %v1345
        %v1356 = vrcp.pop %v1348
        %v1357 = vmul.f32 %v1310, %v1349
        %v1358 = vmul.f32 %v1312, %v1350
        %v1359 = vmul.f32 %v1314, %v1351
        %v1360 = vmul.f32 %v1316, %v1352
        %v1361 = vmul.f32 %v1318, %v1353
        %v1362 = vmul.f32 %v1320, %v1354
        %v1363 = vmul.f32 %v1322, %v1355
        %v1364 = vmul.f32 %v1324, %v1356
        %1365 = vst.msk [vmem:[%s463] sm:$0xff] %vm684, %v1357
        %1366 = vst.msk [vmem:[%s463 + $0x8] sm:$0xff] %vm684, %v1358
        %1367 = vst.msk [vmem:[%s463 + $0x10] sm:$0xff] %vm684, %v1359
        %1368 = vst.msk [vmem:[%s463 + $0x18] sm:$0xff] %vm684, %v1360
        %1369 = vst.msk [vmem:[%s463 + $0x20] sm:$0xff] %vm684, %v1361
        %1370 = vst.msk [vmem:[%s463 + $0x28] sm:$0xff] %vm684, %v1362
        %1371 = vst.msk [vmem:[%s463 + $0x30] sm:$0xff] %vm684, %v1363
        %1372 = vst.msk [vmem:[%s463 + $0x38] sm:$0xff] %vm684, %v1364
        %1373 = vrot.lane.b32.xlu0 %v648, 96
        %v1374 = vpop.permute.xlu0 %1373
        %v1377 = vsel %vm684, %v1357, 0
        %1379 = vmatprep.subr.mxu0 0.0
        %1380 = vmatpush1.msra.mxu0 %v1374
        %1381 = vmatprep.subr.mxu0 0.0
        %1382 = vmatpush1.msra.mxu0 0.0
        %1383 = vmatprep.subr.mxu0 0.0
        %1384 = vmatpush1.msra.mxu0 0.0
        %1385 = vmatprep.subr.mxu0 0.0
        %1386 = vmatpush1.msra.mxu0 0.0
        %1387 = vmatprep.subr.mxu0 0.0
        %1388 = vmatpush1.msra.mxu0 0.0
        %1389 = vmatprep.subr.mxu0 0.0
        %1390 = vmatpush1.msra.mxu0 0.0
        %1391 = vmatprep.subr.mxu0 0.0
        %1392 = vmatpush1.msra.mxu0 0.0
        %1393 = vmatprep.subr.mxu0 0.0
        %1394 = vmatpush1.msra.mxu0 0.0
        %1395 = vmatprep.subr.mxu0 0.0
        %1396 = vmatpush1.msra.mxu0 0.0
        %1397 = vmatprep.subr.mxu0 0.0
        %1398 = vmatpush1.msra.mxu0 0.0
        %1399 = vmatprep.subr.mxu0 0.0
        %1400 = vmatpush1.msra.mxu0 0.0
        %1401 = vmatprep.subr.mxu0 0.0
        %1402 = vmatpush1.msra.mxu0 0.0
        %1403 = vmatprep.subr.mxu0 0.0
        %1404 = vmatpush1.msra.mxu0 0.0
        %1405 = vmatprep.subr.mxu0 0.0
        %1406 = vmatpush1.msra.mxu0 0.0
        %1407 = vmatprep.subr.mxu0 0.0
        %1408 = vmatpush1.msra.mxu0 0.0
        %1409 = vmatprep.subr.mxu0 0.0
        %1410 = vmatpush1.msra.mxu0 0.0
        %1411 = vmatprep.subr.mxu0 0.0
        %1412 = vmatpush1.msra.mxu0 0.0
        %1413 = vmatprep.subr.mxu0 0.0
        %1414 = vmatpush1.msra.mxu0 0.0
        %1415 = vmatprep.subr.mxu0 0.0
        %1416 = vmatpush1.msra.mxu0 0.0
        %1417 = vmatprep.subr.mxu0 0.0
        %1418 = vmatpush1.msra.mxu0 0.0
        %1419 = vmatprep.subr.mxu0 0.0
        %1420 = vmatpush1.msra.mxu0 0.0
        %1421 = vmatprep.subr.mxu0 0.0
        %1422 = vmatpush1.msra.mxu0 0.0
        %1423 = vmatprep.subr.mxu0 0.0
        %1424 = vmatpush1.msra.mxu0 0.0
        %1425 = vmatprep.subr.mxu0 0.0
        %1426 = vmatpush1.msra.mxu0 0.0
        %1427 = vmatprep.subr.mxu0 0.0
        %1428 = vmatpush1.msra.mxu0 0.0
        %1429 = vmatprep.subr.mxu0 0.0
        %1430 = vmatpush1.msra.mxu0 0.0
        %1431 = vmatprep.subr.mxu0 0.0
        %1432 = vmatpush1.msra.mxu0 0.0
        %1433 = vmatprep.subr.mxu0 0.0
        %1434 = vmatpush1.msra.mxu0 0.0
        %1435 = vmatprep.subr.mxu0 0.0
        %1436 = vmatpush1.msra.mxu0 0.0
        %1437 = vmatprep.subr.mxu0 0.0
        %1438 = vmatpush1.msra.mxu0 0.0
        %1439 = vmatprep.subr.mxu0 0.0
        %1440 = vmatpush1.msra.mxu0 0.0
        %1441 = vmatprep.subr.mxu0 0.0
        %1442 = vmatpush1.msra.mxu0 0.0
        %1443 = vmatprep.mubr.f32.mxu0 0.0
        %1444 = vmatmul.mubr.f32.gmra.mrb[0].mxu0 %v1377
        %v1445 = vpop.f32.mrb[0].mxu0
        %v1446 = vadd.f32 0.0, %v1445
        %v1447 = vpop.f32.mrb[0].mxu0
        %1448 = vdwg.mxu0
        %1449 = vrot.lane.b32.xlu0 %v653, 96
        %v1450 = vpop.permute.xlu0 %1449
        %v1453 = vsel %vm684, %v1358, 0
        %1455 = vmatprep.subr.mxu0 0.0
        %1456 = vmatpush1.msra.mxu0 %v1450
        %1457 = vmatprep.subr.mxu0 0.0
        %1458 = vmatpush1.msra.mxu0 0.0
        %1459 = vmatprep.subr.mxu0 0.0
        %1460 = vmatpush1.msra.mxu0 0.0
        %1461 = vmatprep.subr.mxu0 0.0
        %1462 = vmatpush1.msra.mxu0 0.0
        %1463 = vmatprep.subr.mxu0 0.0
        %1464 = vmatpush1.msra.mxu0 0.0
        %1465 = vmatprep.subr.mxu0 0.0
        %1466 = vmatpush1.msra.mxu0 0.0
        %1467 = vmatprep.subr.mxu0 0.0
        %1468 = vmatpush1.msra.mxu0 0.0
        %1469 = vmatprep.subr.mxu0 0.0
        %1470 = vmatpush1.msra.mxu0 0.0
        %1471 = vmatprep.subr.mxu0 0.0
        %1472 = vmatpush1.msra.mxu0 0.0
        %1473 = vmatprep.subr.mxu0 0.0
        %1474 = vmatpush1.msra.mxu0 0.0
        %1475 = vmatprep.subr.mxu0 0.0
        %1476 = vmatpush1.msra.mxu0 0.0
        %1477 = vmatprep.subr.mxu0 0.0
        %1478 = vmatpush1.msra.mxu0 0.0
        %1479 = vmatprep.subr.mxu0 0.0
        %1480 = vmatpush1.msra.mxu0 0.0
        %1481 = vmatprep.subr.mxu0 0.0
        %1482 = vmatpush1.msra.mxu0 0.0
        %1483 = vmatprep.subr.mxu0 0.0
        %1484 = vmatpush1.msra.mxu0 0.0
        %1485 = vmatprep.subr.mxu0 0.0
        %1486 = vmatpush1.msra.mxu0 0.0
        %1487 = vmatprep.subr.mxu0 0.0
        %1488 = vmatpush1.msra.mxu0 0.0
        %1489 = vmatprep.subr.mxu0 0.0
        %1490 = vmatpush1.msra.mxu0 0.0
        %1491 = vmatprep.subr.mxu0 0.0
        %1492 = vmatpush1.msra.mxu0 0.0
        %1493 = vmatprep.subr.mxu0 0.0
        %1494 = vmatpush1.msra.mxu0 0.0
        %1495 = vmatprep.subr.mxu0 0.0
        %1496 = vmatpush1.msra.mxu0 0.0
        %1497 = vmatprep.subr.mxu0 0.0
        %1498 = vmatpush1.msra.mxu0 0.0
        %1499 = vmatprep.subr.mxu0 0.0
        %1500 = vmatpush1.msra.mxu0 0.0
        %1501 = vmatprep.subr.mxu0 0.0
        %1502 = vmatpush1.msra.mxu0 0.0
        %1503 = vmatprep.subr.mxu0 0.0
        %1504 = vmatpush1.msra.mxu0 0.0
        %1505 = vmatprep.subr.mxu0 0.0
        %1506 = vmatpush1.msra.mxu0 0.0
        %1507 = vmatprep.subr.mxu0 0.0
        %1508 = vmatpush1.msra.mxu0 0.0
        %1509 = vmatprep.subr.mxu0 0.0
        %1510 = vmatpush1.msra.mxu0 0.0
        %1511 = vmatprep.subr.mxu0 0.0
        %1512 = vmatpush1.msra.mxu0 0.0
        %1513 = vmatprep.subr.mxu0 0.0
        %1514 = vmatpush1.msra.mxu0 0.0
        %1515 = vmatprep.subr.mxu0 0.0
        %1516 = vmatpush1.msra.mxu0 0.0
        %1517 = vmatprep.subr.mxu0 0.0
        %1518 = vmatpush1.msra.mxu0 0.0
        %1519 = vmatprep.mubr.f32.mxu0 0.0
        %1520 = vmatmul.mubr.f32.gmra.mrb[0].mxu0 %v1453
        %v1521 = vpop.f32.mrb[0].mxu0
        %v1522 = vadd.f32 0.0, %v1521
        %v1523 = vpop.f32.mrb[0].mxu0
        %1524 = vdwg.mxu0
        %1525 = vrot.lane.b32.xlu0 %v673, 96
        %v1526 = vpop.permute.xlu0 %1525
        %v1529 = vsel %vm684, %v1359, 0
        %1531 = vmatprep.subr.mxu0 0.0
        %1532 = vmatpush1.msra.mxu0 %v1526
        %1533 = vmatprep.subr.mxu0 0.0
        %1534 = vmatpush1.msra.mxu0 0.0
        %1535 = vmatprep.subr.mxu0 0.0
        %1536 = vmatpush1.msra.mxu0 0.0
        %1537 = vmatprep.subr.mxu0 0.0
        %1538 = vmatpush1.msra.mxu0 0.0
        %1539 = vmatprep.subr.mxu0 0.0
        %1540 = vmatpush1.msra.mxu0 0.0
        %1541 = vmatprep.subr.mxu0 0.0
        %1542 = vmatpush1.msra.mxu0 0.0
        %1543 = vmatprep.subr.mxu0 0.0
        %1544 = vmatpush1.msra.mxu0 0.0
        %1545 = vmatprep.subr.mxu0 0.0
        %1546 = vmatpush1.msra.mxu0 0.0
        %1547 = vmatprep.subr.mxu0 0.0
        %1548 = vmatpush1.msra.mxu0 0.0
        %1549 = vmatprep.subr.mxu0 0.0
        %1550 = vmatpush1.msra.mxu0 0.0
        %1551 = vmatprep.subr.mxu0 0.0
        %1552 = vmatpush1.msra.mxu0 0.0
        %1553 = vmatprep.subr.mxu0 0.0
        %1554 = vmatpush1.msra.mxu0 0.0
        %1555 = vmatprep.subr.mxu0 0.0
        %1556 = vmatpush1.msra.mxu0 0.0
        %1557 = vmatprep.subr.mxu0 0.0
        %1558 = vmatpush1.msra.mxu0 0.0
        %1559 = vmatprep.subr.mxu0 0.0
        %1560 = vmatpush1.msra.mxu0 0.0
        %1561 = vmatprep.subr.mxu0 0.0
        %1562 = vmatpush1.msra.mxu0 0.0
        %1563 = vmatprep.subr.mxu0 0.0
        %1564 = vmatpush1.msra.mxu0 0.0
        %1565 = vmatprep.subr.mxu0 0.0
        %1566 = vmatpush1.msra.mxu0 0.0
        %1567 = vmatprep.subr.mxu0 0.0
        %1568 = vmatpush1.msra.mxu0 0.0
        %1569 = vmatprep.subr.mxu0 0.0
        %1570 = vmatpush1.msra.mxu0 0.0
        %1571 = vmatprep.subr.mxu0 0.0
        %1572 = vmatpush1.msra.mxu0 0.0
        %1573 = vmatprep.subr.mxu0 0.0
        %1574 = vmatpush1.msra.mxu0 0.0
        %1575 = vmatprep.subr.mxu0 0.0
        %1576 = vmatpush1.msra.mxu0 0.0
        %1577 = vmatprep.subr.mxu0 0.0
        %1578 = vmatpush1.msra.mxu0 0.0
        %1579 = vmatprep.subr.mxu0 0.0
        %1580 = vmatpush1.msra.mxu0 0.0
        %1581 = vmatprep.subr.mxu0 0.0
        %1582 = vmatpush1.msra.mxu0 0.0
        %1583 = vmatprep.subr.mxu0 0.0
        %1584 = vmatpush1.msra.mxu0 0.0
        %1585 = vmatprep.subr.mxu0 0.0
        %1586 = vmatpush1.msra.mxu0 0.0
        %1587 = vmatprep.subr.mxu0 0.0
        %1588 = vmatpush1.msra.mxu0 0.0
        %1589 = vmatprep.subr.mxu0 0.0
        %1590 = vmatpush1.msra.mxu0 0.0
        %1591 = vmatprep.subr.mxu0 0.0
        %1592 = vmatpush1.msra.mxu0 0.0
        %1593 = vmatprep.subr.mxu0 0.0
        %1594 = vmatpush1.msra.mxu0 0.0
        %1595 = vmatprep.mubr.f32.mxu0 0.0
        %1596 = vmatmul.mubr.f32.gmra.mrb[0].mxu0 %v1529
        %v1597 = vpop.f32.mrb[0].mxu0
        %v1598 = vadd.f32 0.0, %v1597
        %v1599 = vpop.f32.mrb[0].mxu0
        %1600 = vdwg.mxu0
        %1601 = vrot.lane.b32.xlu0 %v675, 96
        %v1602 = vpop.permute.xlu0 %1601
        %v1605 = vsel %vm684, %v1360, 0
        %1607 = vmatprep.subr.mxu0 0.0
        %1608 = vmatpush1.msra.mxu0 %v1602
        %1609 = vmatprep.subr.mxu0 0.0
        %1610 = vmatpush1.msra.mxu0 0.0
        %1611 = vmatprep.subr.mxu0 0.0
        %1612 = vmatpush1.msra.mxu0 0.0
        %1613 = vmatprep.subr.mxu0 0.0
        %1614 = vmatpush1.msra.mxu0 0.0
        %1615 = vmatprep.subr.mxu0 0.0
        %1616 = vmatpush1.msra.mxu0 0.0
        %1617 = vmatprep.subr.mxu0 0.0
        %1618 = vmatpush1.msra.mxu0 0.0
        %1619 = vmatprep.subr.mxu0 0.0
        %1620 = vmatpush1.msra.mxu0 0.0
        %1621 = vmatprep.subr.mxu0 0.0
        %1622 = vmatpush1.msra.mxu0 0.0
        %1623 = vmatprep.subr.mxu0 0.0
        %1624 = vmatpush1.msra.mxu0 0.0
        %1625 = vmatprep.subr.mxu0 0.0
        %1626 = vmatpush1.msra.mxu0 0.0
        %1627 = vmatprep.subr.mxu0 0.0
        %1628 = vmatpush1.msra.mxu0 0.0
        %1629 = vmatprep.subr.mxu0 0.0
        %1630 = vmatpush1.msra.mxu0 0.0
        %1631 = vmatprep.subr.mxu0 0.0
        %1632 = vmatpush1.msra.mxu0 0.0
        %1633 = vmatprep.subr.mxu0 0.0
        %1634 = vmatpush1.msra.mxu0 0.0
        %1635 = vmatprep.subr.mxu0 0.0
        %1636 = vmatpush1.msra.mxu0 0.0
        %1637 = vmatprep.subr.mxu0 0.0
        %1638 = vmatpush1.msra.mxu0 0.0
        %1639 = vmatprep.subr.mxu0 0.0
        %1640 = vmatpush1.msra.mxu0 0.0
        %1641 = vmatprep.subr.mxu0 0.0
        %1642 = vmatpush1.msra.mxu0 0.0
        %1643 = vmatprep.subr.mxu0 0.0
        %1644 = vmatpush1.msra.mxu0 0.0
        %1645 = vmatprep.subr.mxu0 0.0
        %1646 = vmatpush1.msra.mxu0 0.0
        %1647 = vmatprep.subr.mxu0 0.0
        %1648 = vmatpush1.msra.mxu0 0.0
        %1649 = vmatprep.subr.mxu0 0.0
        %1650 = vmatpush1.msra.mxu0 0.0
        %1651 = vmatprep.subr.mxu0 0.0
        %1652 = vmatpush1.msra.mxu0 0.0
        %1653 = vmatprep.subr.mxu0 0.0
        %1654 = vmatpush1.msra.mxu0 0.0
        %1655 = vmatprep.subr.mxu0 0.0
        %1656 = vmatpush1.msra.mxu0 0.0
        %1657 = vmatprep.subr.mxu0 0.0
        %1658 = vmatpush1.msra.mxu0 0.0
        %1659 = vmatprep.subr.mxu0 0.0
        %1660 = vmatpush1.msra.mxu0 0.0
        %1661 = vmatprep.subr.mxu0 0.0
        %1662 = vmatpush1.msra.mxu0 0.0
        %1663 = vmatprep.subr.mxu0 0.0
        %1664 = vmatpush1.msra.mxu0 0.0
        %1665 = vmatprep.subr.mxu0 0.0
        %1666 = vmatpush1.msra.mxu0 0.0
        %1667 = vmatprep.subr.mxu0 0.0
        %1668 = vmatpush1.msra.mxu0 0.0
        %1669 = vmatprep.subr.mxu0 0.0
        %1670 = vmatpush1.msra.mxu0 0.0
        %1671 = vmatprep.mubr.f32.mxu0 0.0
        %1672 = vmatmul.mubr.f32.gmra.mrb[0].mxu0 %v1605
        %v1673 = vpop.f32.mrb[0].mxu0
        %v1674 = vadd.f32 0.0, %v1673
        %v1675 = vpop.f32.mrb[0].mxu0
        %1676 = vdwg.mxu0
        %1677 = vrot.lane.b32.xlu0 %v677, 96
        %v1678 = vpop.permute.xlu0 %1677
        %v1681 = vsel %vm684, %v1361, 0
        %1683 = vmatprep.subr.mxu0 0.0
        %1684 = vmatpush1.msra.mxu0 %v1678
        %1685 = vmatprep.subr.mxu0 0.0
        %1686 = vmatpush1.msra.mxu0 0.0
        %1687 = vmatprep.subr.mxu0 0.0
        %1688 = vmatpush1.msra.mxu0 0.0
        %1689 = vmatprep.subr.mxu0 0.0
        %1690 = vmatpush1.msra.mxu0 0.0
        %1691 = vmatprep.subr.mxu0 0.0
        %1692 = vmatpush1.msra.mxu0 0.0
        %1693 = vmatprep.subr.mxu0 0.0
        %1694 = vmatpush1.msra.mxu0 0.0
        %1695 = vmatprep.subr.mxu0 0.0
        %1696 = vmatpush1.msra.mxu0 0.0
        %1697 = vmatprep.subr.mxu0 0.0
        %1698 = vmatpush1.msra.mxu0 0.0
        %1699 = vmatprep.subr.mxu0 0.0
        %1700 = vmatpush1.msra.mxu0 0.0
        %1701 = vmatprep.subr.mxu0 0.0
        %1702 = vmatpush1.msra.mxu0 0.0
        %1703 = vmatprep.subr.mxu0 0.0
        %1704 = vmatpush1.msra.mxu0 0.0
        %1705 = vmatprep.subr.mxu0 0.0
        %1706 = vmatpush1.msra.mxu0 0.0
        %1707 = vmatprep.subr.mxu0 0.0
        %1708 = vmatpush1.msra.mxu0 0.0
        %1709 = vmatprep.subr.mxu0 0.0
        %1710 = vmatpush1.msra.mxu0 0.0
        %1711 = vmatprep.subr.mxu0 0.0
        %1712 = vmatpush1.msra.mxu0 0.0
        %1713 = vmatprep.subr.mxu0 0.0
        %1714 = vmatpush1.msra.mxu0 0.0
        %1715 = vmatprep.subr.mxu0 0.0
        %1716 = vmatpush1.msra.mxu0 0.0
        %1717 = vmatprep.subr.mxu0 0.0
        %1718 = vmatpush1.msra.mxu0 0.0
        %1719 = vmatprep.subr.mxu0 0.0
        %1720 = vmatpush1.msra.mxu0 0.0
        %1721 = vmatprep.subr.mxu0 0.0
        %1722 = vmatpush1.msra.mxu0 0.0
        %1723 = vmatprep.subr.mxu0 0.0
        %1724 = vmatpush1.msra.mxu0 0.0
        %1725 = vmatprep.subr.mxu0 0.0
        %1726 = vmatpush1.msra.mxu0 0.0
        %1727 = vmatprep.subr.mxu0 0.0
        %1728 = vmatpush1.msra.mxu0 0.0
        %1729 = vmatprep.subr.mxu0 0.0
        %1730 = vmatpush1.msra.mxu0 0.0
        %1731 = vmatprep.subr.mxu0 0.0
        %1732 = vmatpush1.msra.mxu0 0.0
        %1733 = vmatprep.subr.mxu0 0.0
        %1734 = vmatpush1.msra.mxu0 0.0
        %1735 = vmatprep.subr.mxu0 0.0
        %1736 = vmatpush1.msra.mxu0 0.0
        %1737 = vmatprep.subr.mxu0 0.0
        %1738 = vmatpush1.msra.mxu0 0.0
        %1739 = vmatprep.subr.mxu0 0.0
        %1740 = vmatpush1.msra.mxu0 0.0
        %1741 = vmatprep.subr.mxu0 0.0
        %1742 = vmatpush1.msra.mxu0 0.0
        %1743 = vmatprep.subr.mxu0 0.0
        %1744 = vmatpush1.msra.mxu0 0.0
        %1745 = vmatprep.subr.mxu0 0.0
        %1746 = vmatpush1.msra.mxu0 0.0
        %1747 = vmatprep.mubr.f32.mxu0 0.0
        %1748 = vmatmul.mubr.f32.gmra.mrb[0].mxu0 %v1681
        %v1749 = vpop.f32.mrb[0].mxu0
        %v1750 = vadd.f32 0.0, %v1749
        %v1751 = vpop.f32.mrb[0].mxu0
        %1752 = vdwg.mxu0
        %1753 = vrot.lane.b32.xlu0 %v679, 96
        %v1754 = vpop.permute.xlu0 %1753
        %v1757 = vsel %vm684, %v1362, 0
        %1759 = vmatprep.subr.mxu0 0.0
        %1760 = vmatpush1.msra.mxu0 %v1754
        %1761 = vmatprep.subr.mxu0 0.0
        %1762 = vmatpush1.msra.mxu0 0.0
        %1763 = vmatprep.subr.mxu0 0.0
        %1764 = vmatpush1.msra.mxu0 0.0
        %1765 = vmatprep.subr.mxu0 0.0
        %1766 = vmatpush1.msra.mxu0 0.0
        %1767 = vmatprep.subr.mxu0 0.0
        %1768 = vmatpush1.msra.mxu0 0.0
        %1769 = vmatprep.subr.mxu0 0.0
        %1770 = vmatpush1.msra.mxu0 0.0
        %1771 = vmatprep.subr.mxu0 0.0
        %1772 = vmatpush1.msra.mxu0 0.0
        %1773 = vmatprep.subr.mxu0 0.0
        %1774 = vmatpush1.msra.mxu0 0.0
        %1775 = vmatprep.subr.mxu0 0.0
        %1776 = vmatpush1.msra.mxu0 0.0
        %1777 = vmatprep.subr.mxu0 0.0
        %1778 = vmatpush1.msra.mxu0 0.0
        %1779 = vmatprep.subr.mxu0 0.0
        %1780 = vmatpush1.msra.mxu0 0.0
        %1781 = vmatprep.subr.mxu0 0.0
        %1782 = vmatpush1.msra.mxu0 0.0
        %1783 = vmatprep.subr.mxu0 0.0
        %1784 = vmatpush1.msra.mxu0 0.0
        %1785 = vmatprep.subr.mxu0 0.0
        %1786 = vmatpush1.msra.mxu0 0.0
        %1787 = vmatprep.subr.mxu0 0.0
        %1788 = vmatpush1.msra.mxu0 0.0
        %1789 = vmatprep.subr.mxu0 0.0
        %1790 = vmatpush1.msra.mxu0 0.0
        %1791 = vmatprep.subr.mxu0 0.0
        %1792 = vmatpush1.msra.mxu0 0.0
        %1793 = vmatprep.subr.mxu0 0.0
        %1794 = vmatpush1.msra.mxu0 0.0
        %1795 = vmatprep.subr.mxu0 0.0
        %1796 = vmatpush1.msra.mxu0 0.0
        %1797 = vmatprep.subr.mxu0 0.0
        %1798 = vmatpush1.msra.mxu0 0.0
        %1799 = vmatprep.subr.mxu0 0.0
        %1800 = vmatpush1.msra.mxu0 0.0
        %1801 = vmatprep.subr.mxu0 0.0
        %1802 = vmatpush1.msra.mxu0 0.0
        %1803 = vmatprep.subr.mxu0 0.0
        %1804 = vmatpush1.msra.mxu0 0.0
        %1805 = vmatprep.subr.mxu0 0.0
        %1806 = vmatpush1.msra.mxu0 0.0
        %1807 = vmatprep.subr.mxu0 0.0
        %1808 = vmatpush1.msra.mxu0 0.0
        %1809 = vmatprep.subr.mxu0 0.0
        %1810 = vmatpush1.msra.mxu0 0.0
        %1811 = vmatprep.subr.mxu0 0.0
        %1812 = vmatpush1.msra.mxu0 0.0
        %1813 = vmatprep.subr.mxu0 0.0
        %1814 = vmatpush1.msra.mxu0 0.0
        %1815 = vmatprep.subr.mxu0 0.0
        %1816 = vmatpush1.msra.mxu0 0.0
        %1817 = vmatprep.subr.mxu0 0.0
        %1818 = vmatpush1.msra.mxu0 0.0
        %1819 = vmatprep.subr.mxu0 0.0
        %1820 = vmatpush1.msra.mxu0 0.0
        %1821 = vmatprep.subr.mxu0 0.0
        %1822 = vmatpush1.msra.mxu0 0.0
        %1823 = vmatprep.mubr.f32.mxu0 0.0
        %1824 = vmatmul.mubr.f32.gmra.mrb[0].mxu0 %v1757
        %v1825 = vpop.f32.mrb[0].mxu0
        %v1826 = vadd.f32 0.0, %v1825
        %v1827 = vpop.f32.mrb[0].mxu0
        %1828 = vdwg.mxu0
        %1829 = vrot.lane.b32.xlu0 %v681, 96
        %v1830 = vpop.permute.xlu0 %1829
        %v1833 = vsel %vm684, %v1363, 0
        %1835 = vmatprep.subr.mxu0 0.0
        %1836 = vmatpush1.msra.mxu0 %v1830
        %1837 = vmatprep.subr.mxu0 0.0
        %1838 = vmatpush1.msra.mxu0 0.0
        %1839 = vmatprep.subr.mxu0 0.0
        %1840 = vmatpush1.msra.mxu0 0.0
        %1841 = vmatprep.subr.mxu0 0.0
        %1842 = vmatpush1.msra.mxu0 0.0
        %1843 = vmatprep.subr.mxu0 0.0
        %1844 = vmatpush1.msra.mxu0 0.0
        %1845 = vmatprep.subr.mxu0 0.0
        %1846 = vmatpush1.msra.mxu0 0.0
        %1847 = vmatprep.subr.mxu0 0.0
        %1848 = vmatpush1.msra.mxu0 0.0
        %1849 = vmatprep.subr.mxu0 0.0
        %1850 = vmatpush1.msra.mxu0 0.0
        %1851 = vmatprep.subr.mxu0 0.0
        %1852 = vmatpush1.msra.mxu0 0.0
        %1853 = vmatprep.subr.mxu0 0.0
        %1854 = vmatpush1.msra.mxu0 0.0
        %1855 = vmatprep.subr.mxu0 0.0
        %1856 = vmatpush1.msra.mxu0 0.0
        %1857 = vmatprep.subr.mxu0 0.0
        %1858 = vmatpush1.msra.mxu0 0.0
        %1859 = vmatprep.subr.mxu0 0.0
        %1860 = vmatpush1.msra.mxu0 0.0
        %1861 = vmatprep.subr.mxu0 0.0
        %1862 = vmatpush1.msra.mxu0 0.0
        %1863 = vmatprep.subr.mxu0 0.0
        %1864 = vmatpush1.msra.mxu0 0.0
        %1865 = vmatprep.subr.mxu0 0.0
        %1866 = vmatpush1.msra.mxu0 0.0
        %1867 = vmatprep.subr.mxu0 0.0
        %1868 = vmatpush1.msra.mxu0 0.0
        %1869 = vmatprep.subr.mxu0 0.0
        %1870 = vmatpush1.msra.mxu0 0.0
        %1871 = vmatprep.subr.mxu0 0.0
        %1872 = vmatpush1.msra.mxu0 0.0
        %1873 = vmatprep.subr.mxu0 0.0
        %1874 = vmatpush1.msra.mxu0 0.0
        %1875 = vmatprep.subr.mxu0 0.0
        %1876 = vmatpush1.msra.mxu0 0.0
        %1877 = vmatprep.subr.mxu0 0.0
        %1878 = vmatpush1.msra.mxu0 0.0
        %1879 = vmatprep.subr.mxu0 0.0
        %1880 = vmatpush1.msra.mxu0 0.0
        %1881 = vmatprep.subr.mxu0 0.0
        %1882 = vmatpush1.msra.mxu0 0.0
        %1883 = vmatprep.subr.mxu0 0.0
        %1884 = vmatpush1.msra.mxu0 0.0
        %1885 = vmatprep.subr.mxu0 0.0
        %1886 = vmatpush1.msra.mxu0 0.0
        %1887 = vmatprep.subr.mxu0 0.0
        %1888 = vmatpush1.msra.mxu0 0.0
        %1889 = vmatprep.subr.mxu0 0.0
        %1890 = vmatpush1.msra.mxu0 0.0
        %1891 = vmatprep.subr.mxu0 0.0
        %1892 = vmatpush1.msra.mxu0 0.0
        %1893 = vmatprep.subr.mxu0 0.0
        %1894 = vmatpush1.msra.mxu0 0.0
        %1895 = vmatprep.subr.mxu0 0.0
        %1896 = vmatpush1.msra.mxu0 0.0
        %1897 = vmatprep.subr.mxu0 0.0
        %1898 = vmatpush1.msra.mxu0 0.0
        %1899 = vmatprep.mubr.f32.mxu0 0.0
        %1900 = vmatmul.mubr.f32.gmra.mrb[0].mxu0 %v1833
        %v1901 = vpop.f32.mrb[0].mxu0
        %v1902 = vadd.f32 0.0, %v1901
        %v1903 = vpop.f32.mrb[0].mxu0
        %1904 = vdwg.mxu0
        %1905 = vrot.lane.b32.xlu0 %v683, 96
        %v1906 = vpop.permute.xlu0 %1905
        %v1909 = vsel %vm684, %v1364, 0
        %1911 = vmatprep.subr.mxu0 0.0
        %1912 = vmatpush1.msra.mxu0 %v1906
        %1913 = vmatprep.subr.mxu0 0.0
        %1914 = vmatpush1.msra.mxu0 0.0
        %1915 = vmatprep.subr.mxu0 0.0
        %1916 = vmatpush1.msra.mxu0 0.0
        %1917 = vmatprep.subr.mxu0 0.0
        %1918 = vmatpush1.msra.mxu0 0.0
        %1919 = vmatprep.subr.mxu0 0.0
        %1920 = vmatpush1.msra.mxu0 0.0
        %1921 = vmatprep.subr.mxu0 0.0
        %1922 = vmatpush1.msra.mxu0 0.0
        %1923 = vmatprep.subr.mxu0 0.0
        %1924 = vmatpush1.msra.mxu0 0.0
        %1925 = vmatprep.subr.mxu0 0.0
        %1926 = vmatpush1.msra.mxu0 0.0
        %1927 = vmatprep.subr.mxu0 0.0
        %1928 = vmatpush1.msra.mxu0 0.0
        %1929 = vmatprep.subr.mxu0 0.0
        %1930 = vmatpush1.msra.mxu0 0.0
        %1931 = vmatprep.subr.mxu0 0.0
        %1932 = vmatpush1.msra.mxu0 0.0
        %1933 = vmatprep.subr.mxu0 0.0
        %1934 = vmatpush1.msra.mxu0 0.0
        %1935 = vmatprep.subr.mxu0 0.0
        %1936 = vmatpush1.msra.mxu0 0.0
        %1937 = vmatprep.subr.mxu0 0.0
        %1938 = vmatpush1.msra.mxu0 0.0
        %1939 = vmatprep.subr.mxu0 0.0
        %1940 = vmatpush1.msra.mxu0 0.0
        %1941 = vmatprep.subr.mxu0 0.0
        %1942 = vmatpush1.msra.mxu0 0.0
        %1943 = vmatprep.subr.mxu0 0.0
        %1944 = vmatpush1.msra.mxu0 0.0
        %1945 = vmatprep.subr.mxu0 0.0
        %1946 = vmatpush1.msra.mxu0 0.0
        %1947 = vmatprep.subr.mxu0 0.0
        %1948 = vmatpush1.msra.mxu0 0.0
        %1949 = vmatprep.subr.mxu0 0.0
        %1950 = vmatpush1.msra.mxu0 0.0
        %1951 = vmatprep.subr.mxu0 0.0
        %1952 = vmatpush1.msra.mxu0 0.0
        %1953 = vmatprep.subr.mxu0 0.0
        %1954 = vmatpush1.msra.mxu0 0.0
        %1955 = vmatprep.subr.mxu0 0.0
        %1956 = vmatpush1.msra.mxu0 0.0
        %1957 = vmatprep.subr.mxu0 0.0
        %1958 = vmatpush1.msra.mxu0 0.0
        %1959 = vmatprep.subr.mxu0 0.0
        %1960 = vmatpush1.msra.mxu0 0.0
        %1961 = vmatprep.subr.mxu0 0.0
        %1962 = vmatpush1.msra.mxu0 0.0
        %1963 = vmatprep.subr.mxu0 0.0
        %1964 = vmatpush1.msra.mxu0 0.0
        %1965 = vmatprep.subr.mxu0 0.0
        %1966 = vmatpush1.msra.mxu0 0.0
        %1967 = vmatprep.subr.mxu0 0.0
        %1968 = vmatpush1.msra.mxu0 0.0
        %1969 = vmatprep.subr.mxu0 0.0
        %1970 = vmatpush1.msra.mxu0 0.0
        %1971 = vmatprep.subr.mxu0 0.0
        %1972 = vmatpush1.msra.mxu0 0.0
        %1973 = vmatprep.subr.mxu0 0.0
        %1974 = vmatpush1.msra.mxu0 0.0
        %1975 = vmatprep.mubr.f32.mxu0 0.0
        %1976 = vmatmul.mubr.f32.gmra.mrb[0].mxu0 %v1909
        %v1977 = vpop.f32.mrb[0].mxu0
        %v1978 = vadd.f32 0.0, %v1977
        %v1979 = vpop.f32.mrb[0].mxu0
        %1980 = vdwg.mxu0
        %1983 = vrot.lane.b32.xlu0 %v1598, 8
        %v1984 = vpop.permute.xlu0 %1983
        %1985 = vrot.lane.b32.xlu0 %v1674, 8
        %v1986 = vpop.permute.xlu0 %1985
        %1991 = vrot.lane.b32.xlu0 %v1750, 16
        %v1992 = vpop.permute.xlu0 %1991
        %1993 = vrot.lane.b32.xlu0 %v1826, 16
        %v1994 = vpop.permute.xlu0 %1993
        %1999 = vrot.lane.b32.xlu0 %v1902, 24
        %v2000 = vpop.permute.xlu0 %1999
        %2001 = vrot.lane.b32.xlu0 %v1978, 24
        %v2002 = vpop.permute.xlu0 %2001
        %v2005 = vsel %vm684, %v1446, %v1984
        %v2006 = vsel %vm684, %v1522, %v1986
        %v2007 = vsel %vm574, %v2005, %v1992
        %v2008 = vsel %vm574, %v2006, %v1994
        %vm2009 = vcmask 195584
        %v2010 = vsel %vm2009, %v2007, %v2000
        %v2011 = vsel %vm2009, %v2008, %v2002
        %v2012 = vadd.f32 %v557, %v2010
        %v2013 = vadd.f32 %v562, %v2011
        %v2014 = vld [vmem:[#allocation10] sm:$0xff]
        %v2015 = vld [vmem:[#allocation10 + $0x8] sm:$0xff]
        %v2016 = vld [vmem:[#allocation10 + $0x10] sm:$0xff]
        %v2017 = vld [vmem:[#allocation10 + $0x18] sm:$0xff]
        %v2018 = vld [vmem:[%s7] sm:$0x1]
        %v2020 = vlaneseq
        %v2021 = vshrl.u32 %v2020, 7
        %v2022 = vsub.s32 0, %v2021
        %v2023 = vrot.slane %v2018, %v2022
        %v2026 = vsel %vm483, %v2012, 0
        %v2029 = vsel %vm483, %v2013, 0
        %2031 = vmatprep.subr.mxu0 0.0
        %2032 = vmatpush1.msra.mxu0 %v2014
        %2033 = vmatprep.subr.mxu0 0.0
        %2034 = vmatpush1.msra.mxu0 %v2015
        %2035 = vmatprep.subr.mxu0 0.0
        %2036 = vmatpush1.msra.mxu0 %v2016
        %2037 = vmatprep.subr.mxu0 0.0
        %2038 = vmatpush1.msra.mxu0 %v2017
        %2039 = vmatprep.subr.mxu0 0.0
        %2040 = vmatpush1.msra.mxu0 0.0
        %2041 = vmatprep.subr.mxu0 0.0
        %2042 = vmatpush1.msra.mxu0 0.0
        %2043 = vmatprep.subr.mxu0 0.0
        %2044 = vmatpush1.msra.mxu0 0.0
        %2045 = vmatprep.subr.mxu0 0.0
        %2046 = vmatpush1.msra.mxu0 0.0
        %2047 = vmatprep.subr.mxu0 0.0
        %2048 = vmatpush1.msra.mxu0 0.0
        %2049 = vmatprep.subr.mxu0 0.0
        %2050 = vmatpush1.msra.mxu0 0.0
        %2051 = vmatprep.subr.mxu0 0.0
        %2052 = vmatpush1.msra.mxu0 0.0
        %2053 = vmatprep.subr.mxu0 0.0
        %2054 = vmatpush1.msra.mxu0 0.0
        %2055 = vmatprep.subr.mxu0 0.0
        %2056 = vmatpush1.msra.mxu0 0.0
        %2057 = vmatprep.subr.mxu0 0.0
        %2058 = vmatpush1.msra.mxu0 0.0
        %2059 = vmatprep.subr.mxu0 0.0
        %2060 = vmatpush1.msra.mxu0 0.0
        %2061 = vmatprep.subr.mxu0 0.0
        %2062 = vmatpush1.msra.mxu0 0.0
        %2063 = vmatprep.subr.mxu0 0.0
        %2064 = vmatpush1.msra.mxu0 0.0
        %2065 = vmatprep.subr.mxu0 0.0
        %2066 = vmatpush1.msra.mxu0 0.0
        %2067 = vmatprep.subr.mxu0 0.0
        %2068 = vmatpush1.msra.mxu0 0.0
        %2069 = vmatprep.subr.mxu0 0.0
        %2070 = vmatpush1.msra.mxu0 0.0
        %2071 = vmatprep.subr.mxu0 0.0
        %2072 = vmatpush1.msra.mxu0 0.0
        %2073 = vmatprep.subr.mxu0 0.0
        %2074 = vmatpush1.msra.mxu0 0.0
        %2075 = vmatprep.subr.mxu0 0.0
        %2076 = vmatpush1.msra.mxu0 0.0
        %2077 = vmatprep.subr.mxu0 0.0
        %2078 = vmatpush1.msra.mxu0 0.0
        %2079 = vmatprep.subr.mxu0 0.0
        %2080 = vmatpush1.msra.mxu0 0.0
        %2081 = vmatprep.subr.mxu0 0.0
        %2082 = vmatpush1.msra.mxu0 0.0
        %2083 = vmatprep.subr.mxu0 0.0
        %2084 = vmatpush1.msra.mxu0 0.0
        %2085 = vmatprep.subr.mxu0 0.0
        %2086 = vmatpush1.msra.mxu0 0.0
        %2087 = vmatprep.subr.mxu0 0.0
        %2088 = vmatpush1.msra.mxu0 0.0
        %2089 = vmatprep.subr.mxu0 0.0
        %2090 = vmatpush1.msra.mxu0 0.0
        %2091 = vmatprep.subr.mxu0 0.0
        %2092 = vmatpush1.msra.mxu0 0.0
        %2093 = vmatprep.subr.mxu0 0.0
        %2094 = vmatpush1.msra.mxu0 0.0
        %2095 = vmatprep.mubr.f32.mxu0 0.0
        %2096 = vmatmul.mubr.f32.gmra.mrb[0].mxu0 %v2026
        %v2097 = vpop.f32.mrb[0].mxu0
        %v2098 = vadd.f32 %v2023, %v2097
        %v2099 = vpop.f32.mrb[0].mxu0
        %2100 = vmatprep.mubr.f32.mxu0 0.0
        %2101 = vmatmul.mubr.f32.gmra.mrb[0].mxu0 %v2029
        %v2102 = vpop.f32.mrb[0].mxu0
        %v2103 = vadd.f32 %v2023, %v2102
        %v2104 = vpop.f32.mrb[0].mxu0
        %2105 = vdwg.mxu0
        %v2106 = vmax.f32 %v2098, 0.0
        %v2107 = vmax.f32 %v2103, 0.0
        %v2108 = vadd.f32 %v2012, %v2106
        %v2109 = vadd.f32 %v2013, %v2107
        %2110 = vst.msk [vmem:[%s456] sm:$0xff] %vm483, %v2108
        %2111 = vst.msk [vmem:[%s456 + $0x8] sm:$0xff] %vm483, %v2109
        %s2112 = sand.u32 %s236, 1
        %s2113 = scalar_lea.sflag [#allocation4], %s2112
        %s2114 = sand.u32 %s236, 1
        %s2115 = smul.addr %s2114, 16
        %s2116 = scalar_lea.vmem [#allocation11], %s2115
        %s2117 = sand.u32 %s264, 1
        %s2118 = scalar_lea.sflag [#allocation13], %s2117
        %s2119 = sand.u32 %s264, 1
        %s2120 = smul.addr %s2119, 64
        %s2121 = scalar_lea.vmem [#allocation12], %s2120
        // Predicated region
        $region73: #{tpu_custom_call.1} parent=51 // pred_check
          %p2122 = pneg %p246
        $region74: #{tpu_custom_call.1} parent=51 // pred_check_branch
          %2124 = sbr.rel (%p2122) target = $region76
        $region75: #{tpu_custom_call.1} parent=51 // pred_region
          %s2125 = smul.u32 2, %s38
          %s2127 = ssub.s32 256, 256
          %2128 = vsyncadd %s2113, %s2127
          %s2129 = sadd.s32 %s39, %s2125
          %s2130 = smul.addr %s2129, 128
          %s2131 = scalar_lea.hbm %s8, %s2130
          %s2132 = sshll.u32 %s2116, 4
          %s2133 = int_to_ptr.vmem [resolvable:$true] %s2132
          %2138 = dma.vmem_to_hbm [thread:$0]  %s2133, 256, %s2131, %s2113, 128, 128, 8
        $region76: #{tpu_custom_call.1} parent=51 // pred_fallthru
          _
        // Predicated region
        $region77: #{tpu_custom_call.1} parent=51 // pred_check
          %p2139 = pneg %p274
        $region78: #{tpu_custom_call.1} parent=51 // pred_check_branch
          %2141 = sbr.rel (%p2139) target = $region80
        $region79: #{tpu_custom_call.1} parent=51 // pred_region
          #allocation15 [shape = 'u32[6]{0}', space=smem, size = 0x18, scoped, tag = 'DMA stride descriptor']
          %s2142 = smul.u32 2, %s38
          %s2144 = ssub.s32 1024, 1024
          %2145 = vsyncadd %s2118, %s2144
          %s2146 = sadd.s32 %s39, %s2142
          %s2147 = smul.addr %s2146, 128
          %s2148 = scalar_lea.hbm %s9, %s2147
          %s2150 = sshll.u32 1, 14
          %s2151 = sxor.u32 4294967295, %s2150
          %s2154 = sshll.u32 7, 18
          %s2155 = sxor.u32 4294967295, %s2154
          %s2156 = sand.u32 0, %s2155
          %s2158 = sor.u32 %s2156, 0
          %s2160 = sshll.u32 3, 24
          %s2161 = sxor.u32 4294967295, %s2160
          %s2162 = sand.u32 %s2158, %s2161
          %s2164 = sor.u32 %s2162, 0
          %s2165 = sshll.u32 %s2121, 4
          %s2166 = int_to_ptr.vmem [resolvable:$true] %s2165
          %2172 = sst [smem:[#allocation15]] 256
          %s2173 = scalar_lea.smem [#allocation15], 1
          %2174 = sst [smem:[%s2173]] 512
          %s2175 = scalar_lea.smem [#allocation15], 2
          %2176 = sst [smem:[%s2175]] 2
          %s2177 = scalar_lea.smem [#allocation15], 3
          %2178 = sst [smem:[%s2177]] 128
          %s2179 = scalar_lea.smem [#allocation15], 4
          %2180 = sst [smem:[%s2179]] 128
          %s2181 = scalar_lea.smem [#allocation15], 5
          %2182 = sst [smem:[%s2181]] 8
          %2184 = dma.general %s2166, 1024, %s2148, %s2118, [#allocation14], [#allocation15], %s2164, 0
        $region80: #{tpu_custom_call.1} parent=51 // pred_fallthru
          _
      $region52: #{tpu_custom_call.1} parent=5 // pred_fallthru
        _
      %p2185 = scmp.le.s32.totalorder 2, %s29
      // Predicated region
      $region81: #{tpu_custom_call.1} parent=5 // pred_check
        %p2186 = pneg %p2185
      $region82: #{tpu_custom_call.1} parent=5 // pred_check_branch
        %2188 = sbr.rel (%p2186) target = $region84
      $region83: #{tpu_custom_call.1} parent=5 // pred_region
        %s2189 = ssub.s32 %s29, 2
        // Predicated region
        $region85: #{tpu_custom_call.1} parent=83 // pred_check
          %p2190 = pneg %p252
        $region86: #{tpu_custom_call.1} parent=83 // pred_check_branch
          %2192 = sbr.rel (%p2190) target = $region88
        $region87: #{tpu_custom_call.1} parent=83 // pred_region
          %s2193 = sand.u32 %s237, 1
          %s2194 = scalar_lea.sflag [#allocation4], %s2193
          %s2195 = sand.u32 %s237, 1
          %s2196 = smul.addr %s2195, 16
          %s2197 = scalar_lea.vmem [#allocation11], %s2196
          %2198 = dma.done %s2194, 256
        $region88: #{tpu_custom_call.1} parent=83 // pred_fallthru
          _
        // Predicated region
        $region89: #{tpu_custom_call.1} parent=83 // pred_check
          %p2199 = pneg %p280
        $region90: #{tpu_custom_call.1} parent=83 // pred_check_branch
          %2201 = sbr.rel (%p2199) target = $region92
        $region91: #{tpu_custom_call.1} parent=83 // pred_region
          %s2202 = sand.u32 %s265, 1
          %s2203 = scalar_lea.sflag [#allocation13], %s2202
          %s2204 = sand.u32 %s265, 1
          %s2205 = smul.addr %s2204, 64
          %s2206 = scalar_lea.vmem [#allocation12], %s2205
          %2207 = dma.done %s2203, 1024
        $region92: #{tpu_custom_call.1} parent=83 // pred_fallthru
          _
      $region84: #{tpu_custom_call.1} parent=5 // pred_fallthru
        _
    $region6: #{tpu_custom_call.1} parent=1 // loop_footer
      %s33 = sadd.s32 1, %s29
    $region7: #{tpu_custom_call.1} parent=1 // loop_footer_branch
      %28 = sbr.rel target = $region3
    $region8: #{tpu_custom_call.1} parent=1 // loop_exit
      _
    %2208 = vsyncpa [#allocation3], 1
    %s2209 = scalar_lea.sflag [#allocation3], 1
    %2210 = vsyncpa %s2209, 1
    %2211 = vsyncpa [#allocation6], 1
    %s2212 = scalar_lea.sflag [#allocation6], 1
    %2213 = vsyncpa %s2212, 1
    %2214 = vsyncpa [#allocation9], 1
    %2215 = vsyncpa [#allocation4], 1
    %s2216 = scalar_lea.sflag [#allocation4], 1
    %2217 = vsyncpa %s2216, 1
    %2218 = vsyncpa [#allocation13], 1
    %s2219 = scalar_lea.sflag [#allocation13], 1
    %2220 = vsyncpa %s2219, 1

</llo_original>
